<compile_context>
chip_gen: v7x
topology: tpu7x:2x2x1
jax: 0.10.0
libtpu: 0.0.40
codegen_flags: <defaults>
</compile_context>

<pallas_src>
import functools

import jax
import jax.numpy as jnp
from jax.experimental import pallas as pl
from jax.experimental.pallas import tpu as pltpu

EPS = 1e-5


# ----------------------------------------------------------------- kernels --

def conv_bn_stats_kernel(offsets, fuse_bn_relu,
                         x_ref, w_ref, mask_ref, scale_ref, shift_ref,
                         y_ref, sum_ref, sq_ref, xcol_ref):
    """3x3 conv as ONE K=9*Cin MXU matmul on the flattened padded grid.

    x_ref    : (1, Cin, Lpad) f32   padded + flattened activations
    w_ref    : (Cout, 9*Cin)  bf16  tap-major / channel-minor conv weights
    mask_ref : (1, Lpad)      f32   1.0 on real pixels, 0.0 on halo ring / tail
    scale_ref, shift_ref : (Cin, 1) f32  previous layer's folded BN affine
    y_ref    : (1, Cout, Lpad) f32  raw conv output (halo columns: don't-care)
    sum_ref, sq_ref : (1, Cout, 1)  per-image masked sum / sum-of-squares
    xcol_ref : (9*Cin, Lpad)  f32   VMEM scratch holding the 9 shifted taps
    """
    x = x_ref[0]                           # (Cin, Lpad)
    mask = mask_ref[...]                   # (1, Lpad)
    if fuse_bn_relu:
        # Previous conv's BN + ReLU fused into this conv's prologue; the mask
        # re-imposes the zero-padding ring that the 3x3 window relies on.
        x = jnp.maximum(x * scale_ref[...] + shift_ref[...], 0.0) * mask

    cin = x.shape[0]
    lpad = x.shape[1]
    # Build the 9 im2col taps in VMEM with cheap lane rotations (no HBM im2col).
    # Interior output positions never read wrapped-around values (proof: the
    # 1-pixel halo absorbs every +-((W+2)+1) offset).
    for t, off in enumerate(offsets):      # static unroll: 9 XLU rotations
        tap = x if off == 0 else pltpu.roll(x, (-off) % lpad, axis=1)
        xcol_ref[t * cin:(t + 1) * cin, :] = tap

    # Single MXU matmul, bf16 operands at native rate, f32 accumulation.
    y = jnp.dot(w_ref[...], xcol_ref[...].astype(jnp.bfloat16),
                preferred_element_type=jnp.float32)        # (Cout, Lpad)
    y_ref[0] = y

    # BatchNorm statistics for *this* conv, accumulated on the fly over real
    # pixels only (mask zeroes the halo ring and the lane-padding tail).
    ym = y * mask
    sum_ref[0] = jnp.sum(ym, axis=1, keepdims=True)
    sq_ref[0] = jnp.sum(ym * ym, axis=1, keepdims=True)


def bn_residual_relu_kernel(y_ref, skip_ref, scale_ref, shift_ref, o_ref):
    """out = relu(bn2(conv2_out) + skip) on the flattened padded grid."""
    z = y_ref[0] * scale_ref[...] + shift_ref[...] + skip_ref[0]
    o_ref[0] = jnp.maximum(z, 0.0)


# ------------------------------------------------------------- pallas glue --

def _conv_pass(xf, w9, mask, scale, shift, offsets, fuse_bn_relu):
    n, cin, lpad = xf.shape
    cout = w9.shape[0]
    kernel = functools.partial(conv_bn_stats_kernel, tuple(offsets),
                               bool(fuse_bn_relu))
    return pl.pallas_call(
        kernel,
        out_shape=(jax.ShapeDtypeStruct((n, cout, lpad), jnp.float32),
                   jax.ShapeDtypeStruct((n, cout, 1), jnp.float32),
                   jax.ShapeDtypeStruct((n, cout, 1), jnp.float32)),
        grid=(n,),
        in_specs=[
            pl.BlockSpec((1, cin, lpad), lambda i: (i, 0, 0)),
            pl.BlockSpec((cout, 9 * cin), lambda i: (0, 0)),
            pl.BlockSpec((1, lpad), lambda i: (0, 0)),
            pl.BlockSpec((cin, 1), lambda i: (0, 0)),
            pl.BlockSpec((cin, 1), lambda i: (0, 0)),
        ],
        out_specs=(
            pl.BlockSpec((1, cout, lpad), lambda i: (i, 0, 0)),
            pl.BlockSpec((1, cout, 1), lambda i: (i, 0, 0)),
            pl.BlockSpec((1, cout, 1), lambda i: (i, 0, 0)),
        ),
        scratch_shapes=[pltpu.VMEM((9 * cin, lpad), jnp.float32)],
        compiler_params=pltpu.CompilerParams(
            dimension_semantics=("parallel",)),
    )(xf, w9, mask, scale, shift)


def _bn_residual_relu(yf, skipf, scale, shift):
    n, c, lpad = yf.shape
    return pl.pallas_call(
        bn_residual_relu_kernel,
        out_shape=jax.ShapeDtypeStruct((n, c, lpad), jnp.float32),
        grid=(n,),
        in_specs=[
            pl.BlockSpec((1, c, lpad), lambda i: (i, 0, 0)),
            pl.BlockSpec((1, c, lpad), lambda i: (i, 0, 0)),
            pl.BlockSpec((c, 1), lambda i: (0, 0)),
            pl.BlockSpec((c, 1), lambda i: (0, 0)),
        ],
        out_specs=pl.BlockSpec((1, c, lpad), lambda i: (i, 0, 0)),
        compiler_params=pltpu.CompilerParams(
            dimension_semantics=("parallel",)),
    )(yf, skipf, scale, shift)


def _bn_affine(psum, psq, gamma, beta, count):
    """Finalize batch stats -> per-channel (scale, shift) for y*scale + shift."""
    s = jnp.sum(psum, axis=0)                      # (C, 1)
    q = jnp.sum(psq, axis=0)                       # (C, 1)
    mean = s / count
    var = q / count - mean * mean                  # biased variance (training BN)
    scale = gamma.reshape(-1, 1) * jax.lax.rsqrt(var + EPS)
    shift = beta.reshape(-1, 1) - mean * scale
    return scale, shift


def _w_to_mat(w):
    """(O, I, 3, 3) -> (O, 9*I) bf16, tap-major / channel-minor ordering."""
    o, i = w.shape[0], w.shape[1]
    return jnp.transpose(w, (0, 2, 3, 1)).reshape(o, 9 * i).astype(jnp.bfloat16)


@jax.jit
def residual_block_forward(x_nchw, params):
    """Pallas implementation of ResidualBlock.forward (NCHW in, NCHW out)."""
    n, c, h, w = x_nchw.shape
    hp, wp = h + 2, w + 2
    lp = hp * wp
    lpad = ((lp + 127) // 128) * 128               # lane-dense last dim
    count = float(n * h * w)
    # Tap offsets on the flattened padded grid; order matches (O, kh, kw, I).
    offsets = tuple((kh - 1) * wp + (kw - 1) for kh in range(3) for kw in range(3))

    x = x_nchw.astype(jnp.float32)
    xf = jnp.pad(x, ((0, 0), (0, 0), (1, 1), (1, 1))).reshape(n, c, lp)
    xf = jnp.pad(xf, ((0, 0), (0, 0), (0, lpad - lp)))          # (N, C, Lpad)

    mask = jnp.pad(jnp.ones((h, w), jnp.float32), ((1, 1), (1, 1))).reshape(1, lp)
    mask = jnp.pad(mask, ((0, 0), (0, lpad - lp)))              # (1, Lpad)

    ones = jnp.ones((c, 1), jnp.float32)
    zeros = jnp.zeros((c, 1), jnp.float32)

    # conv1 + BN1 statistics (conv bias cancels inside training-mode BN).
    y1, s1, q1 = _conv_pass(xf, _w_to_mat(params["w1"]), mask, ones, zeros,
                            offsets, fuse_bn_relu=False)
    scale1, shift1 = _bn_affine(s1, q1, params["g1"], params["bt1"], count)

    # BN1 + ReLU fused into conv2's prologue; conv2 + BN2 statistics.
    y2, s2, q2 = _conv_pass(y1, _w_to_mat(params["w2"]), mask, scale1, shift1,
                            offsets, fuse_bn_relu=True)
    scale2, shift2 = _bn_affine(s2, q2, params["g2"], params["bt2"], count)

    # BN2 + residual add + ReLU (skip reuses the already-padded input slab).
    out_f = _bn_residual_relu(y2, xf, scale2, shift2)

    return out_f[:, :, :lp].reshape(n, c, hp, wp)[:, :, 1:h + 1, 1:w + 1]


# ------------------------------------------------------ pure-JAX reference --

def ref_residual_block(x, params):
    def conv(xx, w, b):
        y = jax.lax.conv_general_dilated(
            xx, w, window_strides=(1, 1), padding=((1, 1), (1, 1)),
            dimension_numbers=("NCHW", "OIHW", "NCHW"),
            precision=jax.lax.Precision.HIGHEST)
        return y + b[None, :, None, None]

    def bn(y, g, bt):
        mean = jnp.mean(y, axis=(0, 2, 3), keepdims=True)
        var = jnp.mean((y - mean) ** 2, axis=(0, 2, 3), keepdims=True)
        z = (y - mean) * jax.lax.rsqrt(var + EPS)
        return z * g[None, :, None, None] + bt[None, :, None, None]

    h = jnp.maximum(bn(conv(x, params["w1"], params["b1"]),
                       params["g1"], params["bt1"]), 0.0)
    y = bn(conv(h, params["w2"], params["b2"]), params["g2"], params["bt2"])
    return jnp.maximum(y + x, 0.0)


# ---------------------------------------------------------------------------

def init_params(key, channels):
    ks = jax.random.split(key, 8)

    def conv_w(k):
        return 0.1 * jax.random.normal(k, (channels, channels, 3, 3), jnp.float32)

    return {
        "w1": conv_w(ks[0]),
        "b1": 0.1 * jax.random.normal(ks[1], (channels,), jnp.float32),
        "g1": 1.0 + 0.1 * jax.random.normal(ks[2], (channels,), jnp.float32),
        "bt1": 0.1 * jax.random.normal(ks[3], (channels,), jnp.float32),
        "w2": conv_w(ks[4]),
        "b2": 0.1 * jax.random.normal(ks[5], (channels,), jnp.float32),
        "g2": 1.0 + 0.1 * jax.random.normal(ks[6], (channels,), jnp.float32),
        "bt2": 0.1 * jax.random.normal(ks[7], (channels,), jnp.float32),
    }


if __name__ == "__main__":
    key = jax.random.PRNGKey(0)
    k_x, k_p = jax.random.split(key)

    N, C, H, W = 2, 4, 16, 16                 # ResidualBlock(channels=4)
    x = jax.random.normal(k_x, (N, C, H, W), jnp.float32)   # NCHW like PyTorch
    params = init_params(k_p, C)

    out = jax.block_until_ready(residual_block_forward(x, params))
    assert out.shape == (N, C, H, W), out.shape

    ref = ref_residual_block(x, params)
    max_err = float(jnp.max(jnp.abs(out - ref)))
    rel_err = float(jnp.linalg.norm(out - ref) / jnp.linalg.norm(ref))
    # bf16 MXU operands (native rate) vs f32 HIGHEST reference -> small gap.
    assert rel_err < 4e-2 and max_err < 0.3, (rel_err, max_err)

    print("KERNEL_OK")
</pallas_src>

<mosaic_0001>
module attributes {stable_mosaic.version = 11 : i64} {
  func.func @conv_bn_stats_kernel(%arg0: i32, %arg1: memref<1x4x384xf32, #tpu.memory_space<vmem>>, %arg2: memref<4x36xbf16, #tpu.memory_space<vmem>>, %arg3: memref<1x384xf32, #tpu.memory_space<vmem>>, %arg4: memref<4x1xf32, #tpu.memory_space<vmem>>, %arg5: memref<4x1xf32, #tpu.memory_space<vmem>>, %arg6: memref<1x4x384xf32, #tpu.memory_space<vmem>>, %arg7: memref<1x4x1xf32, #tpu.memory_space<vmem>>, %arg8: memref<1x4x1xf32, #tpu.memory_space<vmem>>, %arg9: memref<36x384xf32, #tpu.memory_space<vmem>>) attributes {dimension_semantics = [#tpu.dimension_semantics<parallel>], iteration_bounds = array<i64: 2>, scalar_prefetch = 0 : i64, scratch_operands = 1 : i64, tpu.core_type = #tpu.core_type<tc>, window_params = [{transform_indices = @transform_0, window_bounds = array<i64: 1, 4, 384>}, {pipeline_mode = #tpu.pipeline_mode<synchronous>, transform_indices = @transform_1, window_bounds = array<i64: 4, 36>}, {pipeline_mode = #tpu.pipeline_mode<synchronous>, transform_indices = @transform_2, window_bounds = array<i64: 1, 384>}, {pipeline_mode = #tpu.pipeline_mode<synchronous>, transform_indices = @transform_3, window_bounds = array<i64: 4, 1>}, {pipeline_mode = #tpu.pipeline_mode<synchronous>, transform_indices = @transform_4, window_bounds = array<i64: 4, 1>}, {transform_indices = @transform_5, window_bounds = array<i64: 1, 4, 384>}, {transform_indices = @transform_6, window_bounds = array<i64: 1, 4, 1>}, {transform_indices = @transform_7, window_bounds = array<i64: 1, 4, 1>}]} {
    %c0 = arith.constant 0 : index
    %c0_0 = arith.constant 0 : index
    %c0_1 = arith.constant 0 : index
    %0 = vector.load %arg1[%c0, %c0_0, %c0_1] : memref<1x4x384xf32, #tpu.memory_space<vmem>>, vector<1x4x384xf32>
    %1 = vector.shape_cast %0 : vector<1x4x384xf32> to vector<4x384xf32>
    %c0_2 = arith.constant 0 : index
    %c0_3 = arith.constant 0 : index
    %2 = vector.load %arg3[%c0_2, %c0_3] : memref<1x384xf32, #tpu.memory_space<vmem>>, vector<1x384xf32>
    %c19_i32 = arith.constant 19 : i32
    %3 = tpu.dynamic_rotate %1 by %c19_i32 dim 1 : vector<4x384xf32>, i32 -> vector<4x384xf32>
    %c0_4 = arith.constant 0 : index
    %c0_5 = arith.constant 0 : index
    %4 = vector.load %arg9[%c0_4, %c0_5] : memref<36x384xf32, #tpu.memory_space<vmem>>, vector<4x384xf32>
    tpu.vector_store %arg9[%c0_4, %c0_5], %3 {strides = array<i32>} : memref<36x384xf32, #tpu.memory_space<vmem>>, vector<4x384xf32>,
    %c18_i32 = arith.constant 18 : i32
    %5 = tpu.dynamic_rotate %1 by %c18_i32 dim 1 : vector<4x384xf32>, i32 -> vector<4x384xf32>
    %c4 = arith.constant 4 : index
    %c0_6 = arith.constant 0 : index
    %6 = vector.load %arg9[%c4, %c0_6] : memref<36x384xf32, #tpu.memory_space<vmem>>, vector<4x384xf32>
    tpu.vector_store %arg9[%c4, %c0_6], %5 {strides = array<i32>} : memref<36x384xf32, #tpu.memory_space<vmem>>, vector<4x384xf32>,
    %c17_i32 = arith.constant 17 : i32
    %7 = tpu.dynamic_rotate %1 by %c17_i32 dim 1 : vector<4x384xf32>, i32 -> vector<4x384xf32>
    %c8 = arith.constant 8 : index
    %c0_7 = arith.constant 0 : index
    %8 = vector.load %arg9[%c8, %c0_7] : memref<36x384xf32, #tpu.memory_space<vmem>>, vector<4x384xf32>
    tpu.vector_store %arg9[%c8, %c0_7], %7 {strides = array<i32>} : memref<36x384xf32, #tpu.memory_space<vmem>>, vector<4x384xf32>,
    %c1_i32 = arith.constant 1 : i32
    %9 = tpu.dynamic_rotate %1 by %c1_i32 dim 1 : vector<4x384xf32>, i32 -> vector<4x384xf32>
    %c12 = arith.constant 12 : index
    %c0_8 = arith.constant 0 : index
    %10 = vector.load %arg9[%c12, %c0_8] : memref<36x384xf32, #tpu.memory_space<vmem>>, vector<4x384xf32>
    tpu.vector_store %arg9[%c12, %c0_8], %9 {strides = array<i32>} : memref<36x384xf32, #tpu.memory_space<vmem>>, vector<4x384xf32>,
    %c16 = arith.constant 16 : index
    %c0_9 = arith.constant 0 : index
    %11 = vector.load %arg9[%c16, %c0_9] : memref<36x384xf32, #tpu.memory_space<vmem>>, vector<4x384xf32>
    tpu.vector_store %arg9[%c16, %c0_9], %1 {strides = array<i32>} : memref<36x384xf32, #tpu.memory_space<vmem>>, vector<4x384xf32>,
    %c383_i32 = arith.constant 383 : i32
    %12 = tpu.dynamic_rotate %1 by %c383_i32 dim 1 : vector<4x384xf32>, i32 -> vector<4x384xf32>
    %c20 = arith.constant 20 : index
    %c0_10 = arith.constant 0 : index
    %13 = vector.load %arg9[%c20, %c0_10] : memref<36x384xf32, #tpu.memory_space<vmem>>, vector<4x384xf32>
    tpu.vector_store %arg9[%c20, %c0_10], %12 {strides = array<i32>} : memref<36x384xf32, #tpu.memory_space<vmem>>, vector<4x384xf32>,
    %c367_i32 = arith.constant 367 : i32
    %14 = tpu.dynamic_rotate %1 by %c367_i32 dim 1 : vector<4x384xf32>, i32 -> vector<4x384xf32>
    %c24 = arith.constant 24 : index
    %c0_11 = arith.constant 0 : index
    %15 = vector.load %arg9[%c24, %c0_11] : memref<36x384xf32, #tpu.memory_space<vmem>>, vector<4x384xf32>
    tpu.vector_store %arg9[%c24, %c0_11], %14 {strides = array<i32>} : memref<36x384xf32, #tpu.memory_space<vmem>>, vector<4x384xf32>,
    %c366_i32 = arith.constant 366 : i32
    %16 = tpu.dynamic_rotate %1 by %c366_i32 dim 1 : vector<4x384xf32>, i32 -> vector<4x384xf32>
    %c28 = arith.constant 28 : index
    %c0_12 = arith.constant 0 : index
    %17 = vector.load %arg9[%c28, %c0_12] : memref<36x384xf32, #tpu.memory_space<vmem>>, vector<4x384xf32>
    tpu.vector_store %arg9[%c28, %c0_12], %16 {strides = array<i32>} : memref<36x384xf32, #tpu.memory_space<vmem>>, vector<4x384xf32>,
    %c365_i32 = arith.constant 365 : i32
    %18 = tpu.dynamic_rotate %1 by %c365_i32 dim 1 : vector<4x384xf32>, i32 -> vector<4x384xf32>
    %c32 = arith.constant 32 : index
    %c0_13 = arith.constant 0 : index
    %19 = vector.load %arg9[%c32, %c0_13] : memref<36x384xf32, #tpu.memory_space<vmem>>, vector<4x384xf32>
    tpu.vector_store %arg9[%c32, %c0_13], %18 {strides = array<i32>} : memref<36x384xf32, #tpu.memory_space<vmem>>, vector<4x384xf32>,
    %c0_14 = arith.constant 0 : index
    %c0_15 = arith.constant 0 : index
    %20 = vector.load %arg2[%c0_14, %c0_15] : memref<4x36xbf16, #tpu.memory_space<vmem>>, vector<4x36xbf16>
    %c0_16 = arith.constant 0 : index
    %c0_17 = arith.constant 0 : index
    %21 = vector.load %arg9[%c0_16, %c0_17] : memref<36x384xf32, #tpu.memory_space<vmem>>, vector<36x384xf32>
    %22 = arith.truncf %21 : vector<36x384xf32> to vector<36x384xbf16>
    %cst = arith.constant dense<0.000000e+00> : vector<4x384xf32>
    %23 = tpu.matmul %20, %22, %cst {dimension_numbers = #tpu.dot_dimension_numbers<[1], [0], [0], [1], [0, 0, 1, 1], [], []>} : vector<4x36xbf16>, vector<36x384xbf16>, vector<4x384xf32> -> vector<4x384xf32>
    %c0_18 = arith.constant 0 : index
    %c0_19 = arith.constant 0 : index
    %c0_20 = arith.constant 0 : index
    %24 = vector.load %arg6[%c0_18, %c0_19, %c0_20] : memref<1x4x384xf32, #tpu.memory_space<vmem>>, vector<1x4x384xf32>
    %25 = vector.shape_cast %24 : vector<1x4x384xf32> to vector<4x384xf32>
    %26 = vector.shape_cast %23 : vector<4x384xf32> to vector<1x4x384xf32>
    tpu.vector_store %arg6[%c0_18, %c0_19, %c0_20], %26 {strides = array<i32>} : memref<1x4x384xf32, #tpu.memory_space<vmem>>, vector<1x4x384xf32>,
    %27 = vector.broadcast %2 : vector<1x384xf32> to vector<4x384xf32>
    %28 = arith.mulf %23, %27 : vector<4x384xf32>
    %cst_21 = arith.constant dense<0.000000e+00> : vector<4xf32>
    %29 = vector.multi_reduction <add>, %28, %cst_21 [1] : vector<4x384xf32> to vector<4xf32>
    %30 = vector.shape_cast %29 : vector<4xf32> to vector<4x1xf32>
    %c0_22 = arith.constant 0 : index
    %c0_23 = arith.constant 0 : index
    %c0_24 = arith.constant 0 : index
    %31 = vector.load %arg7[%c0_22, %c0_23, %c0_24] : memref<1x4x1xf32, #tpu.memory_space<vmem>>, vector<1x4x1xf32>
    %32 = vector.shape_cast %31 : vector<1x4x1xf32> to vector<4x1xf32>
    %33 = vector.shape_cast %30 : vector<4x1xf32> to vector<1x4x1xf32>
    tpu.vector_store %arg7[%c0_22, %c0_23, %c0_24], %33 {strides = array<i32>} : memref<1x4x1xf32, #tpu.memory_space<vmem>>, vector<1x4x1xf32>,
    %34 = arith.mulf %28, %28 : vector<4x384xf32>
    %cst_25 = arith.constant dense<0.000000e+00> : vector<4xf32>
    %35 = vector.multi_reduction <add>, %34, %cst_25 [1] : vector<4x384xf32> to vector<4xf32>
    %36 = vector.shape_cast %35 : vector<4xf32> to vector<4x1xf32>
    %c0_26 = arith.constant 0 : index
    %c0_27 = arith.constant 0 : index
    %c0_28 = arith.constant 0 : index
    %37 = vector.load %arg8[%c0_26, %c0_27, %c0_28] : memref<1x4x1xf32, #tpu.memory_space<vmem>>, vector<1x4x1xf32>
    %38 = vector.shape_cast %37 : vector<1x4x1xf32> to vector<4x1xf32>
    %39 = vector.shape_cast %36 : vector<4x1xf32> to vector<1x4x1xf32>
    tpu.vector_store %arg8[%c0_26, %c0_27, %c0_28], %39 {strides = array<i32>} : memref<1x4x1xf32, #tpu.memory_space<vmem>>, vector<1x4x1xf32>,
    return
  }
  func.func @transform_0(%arg0: i32) -> (i32, i32, i32) {
    %c0_i32 = arith.constant 0 : i32
    %c0_i32_0 = arith.constant 0 : i32
    %c0_i32_1 = arith.constant 0 : i32
    return %arg0, %c0_i32, %c0_i32_0 : i32, i32, i32
  }
  func.func @transform_1(%arg0: i32) -> (i32, i32) {
    %c0_i32 = arith.constant 0 : i32
    %c0_i32_0 = arith.constant 0 : i32
    %c0_i32_1 = arith.constant 0 : i32
    return %c0_i32, %c0_i32_0 : i32, i32
  }
  func.func @transform_2(%arg0: i32) -> (i32, i32) {
    %c0_i32 = arith.constant 0 : i32
    %c0_i32_0 = arith.constant 0 : i32
    %c0_i32_1 = arith.constant 0 : i32
    return %c0_i32, %c0_i32_0 : i32, i32
  }
  func.func @transform_3(%arg0: i32) -> (i32, i32) {
    %c0_i32 = arith.constant 0 : i32
    %c0_i32_0 = arith.constant 0 : i32
    %c0_i32_1 = arith.constant 0 : i32
    return %c0_i32, %c0_i32_0 : i32, i32
  }
  func.func @transform_4(%arg0: i32) -> (i32, i32) {
    %c0_i32 = arith.constant 0 : i32
    %c0_i32_0 = arith.constant 0 : i32
    %c0_i32_1 = arith.constant 0 : i32
    return %c0_i32, %c0_i32_0 : i32, i32
  }
  func.func @transform_5(%arg0: i32) -> (i32, i32, i32) {
    %c0_i32 = arith.constant 0 : i32
    %c0_i32_0 = arith.constant 0 : i32
    %c0_i32_1 = arith.constant 0 : i32
    return %arg0, %c0_i32, %c0_i32_0 : i32, i32, i32
  }
  func.func @transform_6(%arg0: i32) -> (i32, i32, i32) {
    %c0_i32 = arith.constant 0 : i32
    %c0_i32_0 = arith.constant 0 : i32
    %c0_i32_1 = arith.constant 0 : i32
    return %arg0, %c0_i32, %c0_i32_0 : i32, i32, i32
  }
  func.func @transform_7(%arg0: i32) -> (i32, i32, i32) {
    %c0_i32 = arith.constant 0 : i32
    %c0_i32_0 = arith.constant 0 : i32
    %c0_i32_1 = arith.constant 0 : i32
    return %arg0, %c0_i32, %c0_i32_0 : i32, i32, i32
  }
}

module attributes {stable_mosaic.version = 11 : i64} {
  func.func @bn_residual_relu_kernel(%arg0: i32, %arg1: memref<1x4x384xf32, #tpu.memory_space<vmem>>, %arg2: memref<1x4x384xf32, #tpu.memory_space<vmem>>, %arg3: memref<4x1xf32, #tpu.memory_space<vmem>>, %arg4: memref<4x1xf32, #tpu.memory_space<vmem>>, %arg5: memref<1x4x384xf32, #tpu.memory_space<vmem>>) attributes {dimension_semantics = [#tpu.dimension_semantics<parallel>], iteration_bounds = array<i64: 2>, scalar_prefetch = 0 : i64, scratch_operands = 0 : i64, tpu.core_type = #tpu.core_type<tc>, window_params = [{transform_indices = @transform_0, window_bounds = array<i64: 1, 4, 384>}, {transform_indices = @transform_1, window_bounds = array<i64: 1, 4, 384>}, {pipeline_mode = #tpu.pipeline_mode<synchronous>, transform_indices = @transform_2, window_bounds = array<i64: 4, 1>}, {pipeline_mode = #tpu.pipeline_mode<synchronous>, transform_indices = @transform_3, window_bounds = array<i64: 4, 1>}, {transform_indices = @transform_4, window_bounds = array<i64: 1, 4, 384>}]} {
    %c0 = arith.constant 0 : index
    %c0_0 = arith.constant 0 : index
    %c0_1 = arith.constant 0 : index
    %0 = vector.load %arg1[%c0, %c0_0, %c0_1] : memref<1x4x384xf32, #tpu.memory_space<vmem>>, vector<1x4x384xf32>
    %1 = vector.shape_cast %0 : vector<1x4x384xf32> to vector<4x384xf32>
    %c0_2 = arith.constant 0 : index
    %c0_3 = arith.constant 0 : index
    %2 = vector.load %arg3[%c0_2, %c0_3] : memref<4x1xf32, #tpu.memory_space<vmem>>, vector<4x1xf32>
    %3 = vector.broadcast %2 : vector<4x1xf32> to vector<4x384xf32>
    %4 = arith.mulf %1, %3 : vector<4x384xf32>
    %c0_4 = arith.constant 0 : index
    %c0_5 = arith.constant 0 : index
    %5 = vector.load %arg4[%c0_4, %c0_5] : memref<4x1xf32, #tpu.memory_space<vmem>>, vector<4x1xf32>
    %6 = vector.broadcast %5 : vector<4x1xf32> to vector<4x384xf32>
    %7 = arith.addf %4, %6 : vector<4x384xf32>
    %c0_6 = arith.constant 0 : index
    %c0_7 = arith.constant 0 : index
    %c0_8 = arith.constant 0 : index
    %8 = vector.load %arg2[%c0_6, %c0_7, %c0_8] : memref<1x4x384xf32, #tpu.memory_space<vmem>>, vector<1x4x384xf32>
    %9 = vector.shape_cast %8 : vector<1x4x384xf32> to vector<4x384xf32>
    %10 = arith.addf %7, %9 : vector<4x384xf32>
    %cst = arith.constant 0.000000e+00 : f32
    %11 = vector.broadcast %cst : f32 to vector<4x384xf32>
    %12 = arith.maximumf %10, %11 : vector<4x384xf32>
    %c0_9 = arith.constant 0 : index
    %c0_10 = arith.constant 0 : index
    %c0_11 = arith.constant 0 : index
    %13 = vector.load %arg5[%c0_9, %c0_10, %c0_11] : memref<1x4x384xf32, #tpu.memory_space<vmem>>, vector<1x4x384xf32>
    %14 = vector.shape_cast %13 : vector<1x4x384xf32> to vector<4x384xf32>
    %15 = vector.shape_cast %12 : vector<4x384xf32> to vector<1x4x384xf32>
    tpu.vector_store %arg5[%c0_9, %c0_10, %c0_11], %15 {strides = array<i32>} : memref<1x4x384xf32, #tpu.memory_space<vmem>>, vector<1x4x384xf32>,
    return
  }
  func.func @transform_0(%arg0: i32) -> (i32, i32, i32) {
    %c0_i32 = arith.constant 0 : i32
    %c0_i32_0 = arith.constant 0 : i32
    %c0_i32_1 = arith.constant 0 : i32
    return %arg0, %c0_i32, %c0_i32_0 : i32, i32, i32
  }
  func.func @transform_1(%arg0: i32) -> (i32, i32, i32) {
    %c0_i32 = arith.constant 0 : i32
    %c0_i32_0 = arith.constant 0 : i32
    %c0_i32_1 = arith.constant 0 : i32
    return %arg0, %c0_i32, %c0_i32_0 : i32, i32, i32
  }
  func.func @transform_2(%arg0: i32) -> (i32, i32) {
    %c0_i32 = arith.constant 0 : i32
    %c0_i32_0 = arith.constant 0 : i32
    %c0_i32_1 = arith.constant 0 : i32
    return %c0_i32, %c0_i32_0 : i32, i32
  }
  func.func @transform_3(%arg0: i32) -> (i32, i32) {
    %c0_i32 = arith.constant 0 : i32
    %c0_i32_0 = arith.constant 0 : i32
    %c0_i32_1 = arith.constant 0 : i32
    return %c0_i32, %c0_i32_0 : i32, i32
  }
  func.func @transform_4(%arg0: i32) -> (i32, i32, i32) {
    %c0_i32 = arith.constant 0 : i32
    %c0_i32_0 = arith.constant 0 : i32
    %c0_i32_1 = arith.constant 0 : i32
    return %arg0, %c0_i32, %c0_i32_0 : i32, i32, i32
  }
}

module attributes {stable_mosaic.version = 11 : i64} {
  func.func @conv_bn_stats_kernel(%arg0: i32, %arg1: memref<1x4x384xf32, #tpu.memory_space<vmem>>, %arg2: memref<4x36xbf16, #tpu.memory_space<vmem>>, %arg3: memref<1x384xf32, #tpu.memory_space<vmem>>, %arg4: memref<4x1xf32, #tpu.memory_space<vmem>>, %arg5: memref<4x1xf32, #tpu.memory_space<vmem>>, %arg6: memref<1x4x384xf32, #tpu.memory_space<vmem>>, %arg7: memref<1x4x1xf32, #tpu.memory_space<vmem>>, %arg8: memref<1x4x1xf32, #tpu.memory_space<vmem>>, %arg9: memref<36x384xf32, #tpu.memory_space<vmem>>) attributes {dimension_semantics = [#tpu.dimension_semantics<parallel>], iteration_bounds = array<i64: 2>, scalar_prefetch = 0 : i64, scratch_operands = 1 : i64, tpu.core_type = #tpu.core_type<tc>, window_params = [{transform_indices = @transform_0, window_bounds = array<i64: 1, 4, 384>}, {pipeline_mode = #tpu.pipeline_mode<synchronous>, transform_indices = @transform_1, window_bounds = array<i64: 4, 36>}, {pipeline_mode = #tpu.pipeline_mode<synchronous>, transform_indices = @transform_2, window_bounds = array<i64: 1, 384>}, {pipeline_mode = #tpu.pipeline_mode<synchronous>, transform_indices = @transform_3, window_bounds = array<i64: 4, 1>}, {pipeline_mode = #tpu.pipeline_mode<synchronous>, transform_indices = @transform_4, window_bounds = array<i64: 4, 1>}, {transform_indices = @transform_5, window_bounds = array<i64: 1, 4, 384>}, {transform_indices = @transform_6, window_bounds = array<i64: 1, 4, 1>}, {transform_indices = @transform_7, window_bounds = array<i64: 1, 4, 1>}]} {
    %c0 = arith.constant 0 : index
    %c0_0 = arith.constant 0 : index
    %c0_1 = arith.constant 0 : index
    %0 = vector.load %arg1[%c0, %c0_0, %c0_1] : memref<1x4x384xf32, #tpu.memory_space<vmem>>, vector<1x4x384xf32>
    %1 = vector.shape_cast %0 : vector<1x4x384xf32> to vector<4x384xf32>
    %c0_2 = arith.constant 0 : index
    %c0_3 = arith.constant 0 : index
    %2 = vector.load %arg3[%c0_2, %c0_3] : memref<1x384xf32, #tpu.memory_space<vmem>>, vector<1x384xf32>
    %c0_4 = arith.constant 0 : index
    %c0_5 = arith.constant 0 : index
    %3 = vector.load %arg4[%c0_4, %c0_5] : memref<4x1xf32, #tpu.memory_space<vmem>>, vector<4x1xf32>
    %4 = vector.broadcast %3 : vector<4x1xf32> to vector<4x384xf32>
    %5 = arith.mulf %1, %4 : vector<4x384xf32>
    %c0_6 = arith.constant 0 : index
    %c0_7 = arith.constant 0 : index
    %6 = vector.load %arg5[%c0_6, %c0_7] : memref<4x1xf32, #tpu.memory_space<vmem>>, vector<4x1xf32>
    %7 = vector.broadcast %6 : vector<4x1xf32> to vector<4x384xf32>
    %8 = arith.addf %5, %7 : vector<4x384xf32>
    %cst = arith.constant 0.000000e+00 : f32
    %9 = vector.broadcast %cst : f32 to vector<4x384xf32>
    %10 = arith.maximumf %8, %9 : vector<4x384xf32>
    %11 = vector.broadcast %2 : vector<1x384xf32> to vector<4x384xf32>
    %12 = arith.mulf %10, %11 : vector<4x384xf32>
    %c19_i32 = arith.constant 19 : i32
    %13 = tpu.dynamic_rotate %12 by %c19_i32 dim 1 : vector<4x384xf32>, i32 -> vector<4x384xf32>
    %c0_8 = arith.constant 0 : index
    %c0_9 = arith.constant 0 : index
    %14 = vector.load %arg9[%c0_8, %c0_9] : memref<36x384xf32, #tpu.memory_space<vmem>>, vector<4x384xf32>
    tpu.vector_store %arg9[%c0_8, %c0_9], %13 {strides = array<i32>} : memref<36x384xf32, #tpu.memory_space<vmem>>, vector<4x384xf32>,
    %c18_i32 = arith.constant 18 : i32
    %15 = tpu.dynamic_rotate %12 by %c18_i32 dim 1 : vector<4x384xf32>, i32 -> vector<4x384xf32>
    %c4 = arith.constant 4 : index
    %c0_10 = arith.constant 0 : index
    %16 = vector.load %arg9[%c4, %c0_10] : memref<36x384xf32, #tpu.memory_space<vmem>>, vector<4x384xf32>
    tpu.vector_store %arg9[%c4, %c0_10], %15 {strides = array<i32>} : memref<36x384xf32, #tpu.memory_space<vmem>>, vector<4x384xf32>,
    %c17_i32 = arith.constant 17 : i32
    %17 = tpu.dynamic_rotate %12 by %c17_i32 dim 1 : vector<4x384xf32>, i32 -> vector<4x384xf32>
    %c8 = arith.constant 8 : index
    %c0_11 = arith.constant 0 : index
    %18 = vector.load %arg9[%c8, %c0_11] : memref<36x384xf32, #tpu.memory_space<vmem>>, vector<4x384xf32>
    tpu.vector_store %arg9[%c8, %c0_11], %17 {strides = array<i32>} : memref<36x384xf32, #tpu.memory_space<vmem>>, vector<4x384xf32>,
    %c1_i32 = arith.constant 1 : i32
    %19 = tpu.dynamic_rotate %12 by %c1_i32 dim 1 : vector<4x384xf32>, i32 -> vector<4x384xf32>
    %c12 = arith.constant 12 : index
    %c0_12 = arith.constant 0 : index
    %20 = vector.load %arg9[%c12, %c0_12] : memref<36x384xf32, #tpu.memory_space<vmem>>, vector<4x384xf32>
    tpu.vector_store %arg9[%c12, %c0_12], %19 {strides = array<i32>} : memref<36x384xf32, #tpu.memory_space<vmem>>, vector<4x384xf32>,
    %c16 = arith.constant 16 : index
    %c0_13 = arith.constant 0 : index
    %21 = vector.load %arg9[%c16, %c0_13] : memref<36x384xf32, #tpu.memory_space<vmem>>, vector<4x384xf32>
    tpu.vector_store %arg9[%c16, %c0_13], %12 {strides = array<i32>} : memref<36x384xf32, #tpu.memory_space<vmem>>, vector<4x384xf32>,
    %c383_i32 = arith.constant 383 : i32
    %22 = tpu.dynamic_rotate %12 by %c383_i32 dim 1 : vector<4x384xf32>, i32 -> vector<4x384xf32>
    %c20 = arith.constant 20 : index
    %c0_14 = arith.constant 0 : index
    %23 = vector.load %arg9[%c20, %c0_14] : memref<36x384xf32, #tpu.memory_space<vmem>>, vector<4x384xf32>
    tpu.vector_store %arg9[%c20, %c0_14], %22 {strides = array<i32>} : memref<36x384xf32, #tpu.memory_space<vmem>>, vector<4x384xf32>,
    %c367_i32 = arith.constant 367 : i32
    %24 = tpu.dynamic_rotate %12 by %c367_i32 dim 1 : vector<4x384xf32>, i32 -> vector<4x384xf32>
    %c24 = arith.constant 24 : index
    %c0_15 = arith.constant 0 : index
    %25 = vector.load %arg9[%c24, %c0_15] : memref<36x384xf32, #tpu.memory_space<vmem>>, vector<4x384xf32>
    tpu.vector_store %arg9[%c24, %c0_15], %24 {strides = array<i32>} : memref<36x384xf32, #tpu.memory_space<vmem>>, vector<4x384xf32>,
    %c366_i32 = arith.constant 366 : i32
    %26 = tpu.dynamic_rotate %12 by %c366_i32 dim 1 : vector<4x384xf32>, i32 -> vector<4x384xf32>
    %c28 = arith.constant 28 : index
    %c0_16 = arith.constant 0 : index
    %27 = vector.load %arg9[%c28, %c0_16] : memref<36x384xf32, #tpu.memory_space<vmem>>, vector<4x384xf32>
    tpu.vector_store %arg9[%c28, %c0_16], %26 {strides = array<i32>} : memref<36x384xf32, #tpu.memory_space<vmem>>, vector<4x384xf32>,
    %c365_i32 = arith.constant 365 : i32
    %28 = tpu.dynamic_rotate %12 by %c365_i32 dim 1 : vector<4x384xf32>, i32 -> vector<4x384xf32>
    %c32 = arith.constant 32 : index
    %c0_17 = arith.constant 0 : index
    %29 = vector.load %arg9[%c32, %c0_17] : memref<36x384xf32, #tpu.memory_space<vmem>>, vector<4x384xf32>
    tpu.vector_store %arg9[%c32, %c0_17], %28 {strides = array<i32>} : memref<36x384xf32, #tpu.memory_space<vmem>>, vector<4x384xf32>,
    %c0_18 = arith.constant 0 : index
    %c0_19 = arith.constant 0 : index
    %30 = vector.load %arg2[%c0_18, %c0_19] : memref<4x36xbf16, #tpu.memory_space<vmem>>, vector<4x36xbf16>
    %c0_20 = arith.constant 0 : index
    %c0_21 = arith.constant 0 : index
    %31 = vector.load %arg9[%c0_20, %c0_21] : memref<36x384xf32, #tpu.memory_space<vmem>>, vector<36x384xf32>
    %32 = arith.truncf %31 : vector<36x384xf32> to vector<36x384xbf16>
    %cst_22 = arith.constant dense<0.000000e+00> : vector<4x384xf32>
    %33 = tpu.matmul %30, %32, %cst_22 {dimension_numbers = #tpu.dot_dimension_numbers<[1], [0], [0], [1], [0, 0, 1, 1], [], []>} : vector<4x36xbf16>, vector<36x384xbf16>, vector<4x384xf32> -> vector<4x384xf32>
    %c0_23 = arith.constant 0 : index
    %c0_24 = arith.constant 0 : index
    %c0_25 = arith.constant 0 : index
    %34 = vector.load %arg6[%c0_23, %c0_24, %c0_25] : memref<1x4x384xf32, #tpu.memory_space<vmem>>, vector<1x4x384xf32>
    %35 = vector.shape_cast %34 : vector<1x4x384xf32> to vector<4x384xf32>
    %36 = vector.shape_cast %33 : vector<4x384xf32> to vector<1x4x384xf32>
    tpu.vector_store %arg6[%c0_23, %c0_24, %c0_25], %36 {strides = array<i32>} : memref<1x4x384xf32, #tpu.memory_space<vmem>>, vector<1x4x384xf32>,
    %37 = vector.broadcast %2 : vector<1x384xf32> to vector<4x384xf32>
    %38 = arith.mulf %33, %37 : vector<4x384xf32>
    %cst_26 = arith.constant dense<0.000000e+00> : vector<4xf32>
    %39 = vector.multi_reduction <add>, %38, %cst_26 [1] : vector<4x384xf32> to vector<4xf32>
    %40 = vector.shape_cast %39 : vector<4xf32> to vector<4x1xf32>
    %c0_27 = arith.constant 0 : index
    %c0_28 = arith.constant 0 : index
    %c0_29 = arith.constant 0 : index
    %41 = vector.load %arg7[%c0_27, %c0_28, %c0_29] : memref<1x4x1xf32, #tpu.memory_space<vmem>>, vector<1x4x1xf32>
    %42 = vector.shape_cast %41 : vector<1x4x1xf32> to vector<4x1xf32>
    %43 = vector.shape_cast %40 : vector<4x1xf32> to vector<1x4x1xf32>
    tpu.vector_store %arg7[%c0_27, %c0_28, %c0_29], %43 {strides = array<i32>} : memref<1x4x1xf32, #tpu.memory_space<vmem>>, vector<1x4x1xf32>,
    %44 = arith.mulf %38, %38 : vector<4x384xf32>
    %cst_30 = arith.constant dense<0.000000e+00> : vector<4xf32>
    %45 = vector.multi_reduction <add>, %44, %cst_30 [1] : vector<4x384xf32> to vector<4xf32>
    %46 = vector.shape_cast %45 : vector<4xf32> to vector<4x1xf32>
    %c0_31 = arith.constant 0 : index
    %c0_32 = arith.constant 0 : index
    %c0_33 = arith.constant 0 : index
    %47 = vector.load %arg8[%c0_31, %c0_32, %c0_33] : memref<1x4x1xf32, #tpu.memory_space<vmem>>, vector<1x4x1xf32>
    %48 = vector.shape_cast %47 : vector<1x4x1xf32> to vector<4x1xf32>
    %49 = vector.shape_cast %46 : vector<4x1xf32> to vector<1x4x1xf32>
    tpu.vector_store %arg8[%c0_31, %c0_32, %c0_33], %49 {strides = array<i32>} : memref<1x4x1xf32, #tpu.memory_space<vmem>>, vector<1x4x1xf32>,
    return
  }
  func.func @transform_0(%arg0: i32) -> (i32, i32, i32) {
    %c0_i32 = arith.constant 0 : i32
    %c0_i32_0 = arith.constant 0 : i32
    %c0_i32_1 = arith.constant 0 : i32
    return %arg0, %c0_i32, %c0_i32_0 : i32, i32, i32
  }
  func.func @transform_1(%arg0: i32) -> (i32, i32) {
    %c0_i32 = arith.constant 0 : i32
    %c0_i32_0 = arith.constant 0 : i32
    %c0_i32_1 = arith.constant 0 : i32
    return %c0_i32, %c0_i32_0 : i32, i32
  }
  func.func @transform_2(%arg0: i32) -> (i32, i32) {
    %c0_i32 = arith.constant 0 : i32
    %c0_i32_0 = arith.constant 0 : i32
    %c0_i32_1 = arith.constant 0 : i32
    return %c0_i32, %c0_i32_0 : i32, i32
  }
  func.func @transform_3(%arg0: i32) -> (i32, i32) {
    %c0_i32 = arith.constant 0 : i32
    %c0_i32_0 = arith.constant 0 : i32
    %c0_i32_1 = arith.constant 0 : i32
    return %c0_i32, %c0_i32_0 : i32, i32
  }
  func.func @transform_4(%arg0: i32) -> (i32, i32) {
    %c0_i32 = arith.constant 0 : i32
    %c0_i32_0 = arith.constant 0 : i32
    %c0_i32_1 = arith.constant 0 : i32
    return %c0_i32, %c0_i32_0 : i32, i32
  }
  func.func @transform_5(%arg0: i32) -> (i32, i32, i32) {
    %c0_i32 = arith.constant 0 : i32
    %c0_i32_0 = arith.constant 0 : i32
    %c0_i32_1 = arith.constant 0 : i32
    return %arg0, %c0_i32, %c0_i32_0 : i32, i32, i32
  }
  func.func @transform_6(%arg0: i32) -> (i32, i32, i32) {
    %c0_i32 = arith.constant 0 : i32
    %c0_i32_0 = arith.constant 0 : i32
    %c0_i32_1 = arith.constant 0 : i32
    return %arg0, %c0_i32, %c0_i32_0 : i32, i32, i32
  }
  func.func @transform_7(%arg0: i32) -> (i32, i32, i32) {
    %c0_i32 = arith.constant 0 : i32
    %c0_i32_0 = arith.constant 0 : i32
    %c0_i32_1 = arith.constant 0 : i32
    return %arg0, %c0_i32, %c0_i32_0 : i32, i32, i32
  }
}

</mosaic_0001>

<llo_original>
// kernel: residual_block_forward.5
$region0: #{residual_block_forward.5}
  #allocation0 [shape = 'u32[]', space=smem, size = 0x4, offset = 0x4, fixed_abs, tag = 'smem constant byte address 0x4 - core index']
  #allocation1 [shape = 'u32[144,128]{1,0:T(1,128)}', space=vmem, size = 0x12000, scoped, tag = 'internal scratch']
  %s0 = inlined_call_operand.vmem [shape: f32[2,4,384], index: 0, kind: input, shape index: {}]
  %s1 = inlined_call_operand.vmem [shape: f32[2,4,384], index: 1, kind: input, shape index: {}]
  %s2 = inlined_call_operand.vmem [shape: f32[4,1], index: 2, kind: input, shape index: {}]
  %s3 = inlined_call_operand.vmem [shape: f32[4,1], index: 3, kind: input, shape index: {}]
  %s4 = inlined_call_operand.vmem [shape: f32[2,4,384], index: 4, kind: output, shape index: {}]
  %s5 = sld [smem:[#allocation0]]
  $region49: #{residual_block_forward.5} parent=0
    _
  %s7 = ssub.s32 1, %s5
  %s8 = scalar_select 0, %s7, %s5
  loop: start=0, step=1, limit=4
  $region2: #{residual_block_forward.5} parent=0 // loop_pre_header
    _
  $region3: #{residual_block_forward.5} parent=0 // loop_header
    %s10 = sphi 0, %s14
    %p11 = scmp.ge.s32.totalorder %s10, 4
    %s20 = sphi 0, %s22
    %s23 = sphi 0, %s20
    %s24 = sphi 0, %s23
    %s40 = sphi 0, %s24
    %s46 = sphi 0, %s48
    %s49 = sphi 0, %s46
    %s50 = sphi 0, %s49
    %s66 = sphi 0, %s50
    %s70 = sphi 0, %s70
    %s72 = sphi 0, %s70
    %s73 = sphi 0, %s72
    %s87 = sphi 0, %s73
    %s91 = sphi 0, %s91
    %s93 = sphi 0, %s91
    %s94 = sphi 0, %s93
    %s108 = sphi 0, %s94
    %s114 = sphi 0, %s116
    %s117 = sphi 0, %s114
    %s118 = sphi 0, %s117
    %s134 = sphi 0, %s118
  $region4: #{residual_block_forward.5} parent=0 // loop_header_branch
    %13 = sbr.rel (%p11) target = $region8
  $region5: #{residual_block_forward.5} parent=0 // loop_body
    %s15 = ssub.s32 %s10, 1
    %s16 = ssub.s32 %s10, 2
    %s17 = sadd.s32 %s10, 1
    %s18 = ssub.s32 %s10, %s17
    %p19 = scmp.eq.s32.totalorder %s18, 0
    %s21 = sadd.s32 %s20, 1
    %s22 = scalar_select %p19, %s20, %s21
    %p25 = pneg %p19
    %p26 = scmp.eq.s32.totalorder %s10, 1
    %p27 = por %p25, %p26
    %p28 = scmp.ne.s32.totalorder %s20, %s23
    %p29 = scmp.eq.s32.totalorder %s10, 0
    %p30 = por %p28, %p29
    %p31 = scmp.ne.s32.totalorder %s20, %s23
    %p32 = scmp.eq.s32.totalorder %s15, 1
    %p33 = por %p31, %p32
    %p34 = scmp.ne.s32.totalorder %s23, %s24
    %p35 = scmp.eq.s32.totalorder %s15, 0
    %p36 = por %p34, %p35
    %p37 = scmp.ne.s32.totalorder %s23, %s24
    %p38 = scmp.eq.s32.totalorder %s16, 1
    %p39 = por %p37, %p38
    %p41 = scmp.ne.s32.totalorder %s24, %s40
    %p42 = scmp.eq.s32.totalorder %s16, 0
    %p43 = por %p41, %p42
    %s44 = ssub.s32 %s10, %s17
    %p45 = scmp.eq.s32.totalorder %s44, 0
    %s47 = sadd.s32 %s46, 1
    %s48 = scalar_select %p45, %s46, %s47
    %p51 = pneg %p45
    %p52 = scmp.eq.s32.totalorder %s10, 1
    %p53 = por %p51, %p52
    %p54 = scmp.ne.s32.totalorder %s46, %s49
    %p55 = scmp.eq.s32.totalorder %s10, 0
    %p56 = por %p54, %p55
    %p57 = scmp.ne.s32.totalorder %s46, %s49
    %p58 = scmp.eq.s32.totalorder %s15, 1
    %p59 = por %p57, %p58
    %p60 = scmp.ne.s32.totalorder %s49, %s50
    %p61 = scmp.eq.s32.totalorder %s15, 0
    %p62 = por %p60, %p61
    %p63 = scmp.ne.s32.totalorder %s49, %s50
    %p64 = scmp.eq.s32.totalorder %s16, 1
    %p65 = por %p63, %p64
    %p67 = scmp.ne.s32.totalorder %s50, %s66
    %p68 = scmp.eq.s32.totalorder %s16, 0
    %p69 = por %p67, %p68
    %s71 = sadd.s32 %s70, 1
    %p74 = scmp.eq.s32.totalorder %s10, 1
    %p75 = scmp.ne.s32.totalorder %s70, %s72
    %p76 = scmp.eq.s32.totalorder %s10, 0
    %p77 = por %p75, %p76
    %p78 = scmp.ne.s32.totalorder %s70, %s72
    %p79 = scmp.eq.s32.totalorder %s15, 1
    %p80 = por %p78, %p79
    %p81 = scmp.ne.s32.totalorder %s72, %s73
    %p82 = scmp.eq.s32.totalorder %s15, 0
    %p83 = por %p81, %p82
    %p84 = scmp.ne.s32.totalorder %s72, %s73
    %p85 = scmp.eq.s32.totalorder %s16, 1
    %p86 = por %p84, %p85
    %p88 = scmp.ne.s32.totalorder %s73, %s87
    %p89 = scmp.eq.s32.totalorder %s16, 0
    %p90 = por %p88, %p89
    %s92 = sadd.s32 %s91, 1
    %p95 = scmp.eq.s32.totalorder %s10, 1
    %p96 = scmp.ne.s32.totalorder %s91, %s93
    %p97 = scmp.eq.s32.totalorder %s10, 0
    %p98 = por %p96, %p97
    %p99 = scmp.ne.s32.totalorder %s91, %s93
    %p100 = scmp.eq.s32.totalorder %s15, 1
    %p101 = por %p99, %p100
    %p102 = scmp.ne.s32.totalorder %s93, %s94
    %p103 = scmp.eq.s32.totalorder %s15, 0
    %p104 = por %p102, %p103
    %p105 = scmp.ne.s32.totalorder %s93, %s94
    %p106 = scmp.eq.s32.totalorder %s16, 1
    %p107 = por %p105, %p106
    %p109 = scmp.ne.s32.totalorder %s94, %s108
    %p110 = scmp.eq.s32.totalorder %s16, 0
    %p111 = por %p109, %p110
    %s112 = ssub.s32 %s10, %s17
    %p113 = scmp.eq.s32.totalorder %s112, 0
    %s115 = sadd.s32 %s114, 1
    %s116 = scalar_select %p113, %s114, %s115
    %p119 = pneg %p113
    %p120 = scmp.eq.s32.totalorder %s10, 1
    %p121 = por %p119, %p120
    %p122 = scmp.ne.s32.totalorder %s114, %s117
    %p123 = scmp.eq.s32.totalorder %s10, 0
    %p124 = por %p122, %p123
    %p125 = scmp.ne.s32.totalorder %s114, %s117
    %p126 = scmp.eq.s32.totalorder %s15, 1
    %p127 = por %p125, %p126
    %p128 = scmp.ne.s32.totalorder %s117, %s118
    %p129 = scmp.eq.s32.totalorder %s15, 0
    %p130 = por %p128, %p129
    %p131 = scmp.ne.s32.totalorder %s117, %s118
    %p132 = scmp.eq.s32.totalorder %s16, 1
    %p133 = por %p131, %p132
    %p135 = scmp.ne.s32.totalorder %s118, %s134
    %p136 = scmp.eq.s32.totalorder %s16, 0
    %p137 = por %p135, %p136
    %p138 = scmp.le.s32.totalorder 1, %s10
    %p139 = scmp.lt.s32.totalorder %s10, 3
    %p140 = pnand %p138, %p139
    %p141 = pneg %p140
    // Predicated region
    $region9: #{residual_block_forward.5} parent=5 // pred_check
      _
    $region10: #{residual_block_forward.5} parent=5 // pred_check_branch
      %143 = sbr.rel (%p140) target = $region12
    $region11: #{residual_block_forward.5} parent=5 // pred_region
      %s144 = ssub.s32 %s10, 1
      // Predicated region
      $region13: #{residual_block_forward.5} parent=11 // pred_check
        %p145 = pneg %p83
      $region14: #{residual_block_forward.5} parent=11 // pred_check_branch
        %147 = sbr.rel (%p145) target = $region16
      $region15: #{residual_block_forward.5} parent=11 // pred_region
        _
      $region16: #{residual_block_forward.5} parent=11 // pred_fallthru
        _
      // Predicated region
      $region17: #{residual_block_forward.5} parent=11 // pred_check
        %p148 = pneg %p104
      $region18: #{residual_block_forward.5} parent=11 // pred_check_branch
        %150 = sbr.rel (%p148) target = $region20
      $region19: #{residual_block_forward.5} parent=11 // pred_region
        _
      $region20: #{residual_block_forward.5} parent=11 // pred_fallthru
        _
    $region12: #{residual_block_forward.5} parent=5 // pred_fallthru
      _
    %p151 = scmp.lt.s32.totalorder %s10, 2
    // Predicated region
    $region21: #{residual_block_forward.5} parent=5 // pred_check
      %p152 = pneg %p151
    $region22: #{residual_block_forward.5} parent=5 // pred_check_branch
      %154 = sbr.rel (%p152) target = $region24
    $region23: #{residual_block_forward.5} parent=5 // pred_region
      // Predicated region
      $region25: #{residual_block_forward.5} parent=23 // pred_check
        %p155 = pneg %p30
      $region26: #{residual_block_forward.5} parent=23 // pred_check_branch
        %157 = sbr.rel (%p155) target = $region28
      $region27: #{residual_block_forward.5} parent=23 // pred_region
        %p158 = scmp.lt.s32.totalorder %s10, 1
        %s159 = scalar_select %p158, %s10, 1
        %s160 = smul.addr %s159, 3
        %s161 = smul.addr %s160, 4
        %s162 = scalar_lea.vmem %s0, %s161
      $region28: #{residual_block_forward.5} parent=23 // pred_fallthru
        _
      // Predicated region
      $region29: #{residual_block_forward.5} parent=23 // pred_check
        %p163 = pneg %p56
      $region30: #{residual_block_forward.5} parent=23 // pred_check_branch
        %165 = sbr.rel (%p163) target = $region32
      $region31: #{residual_block_forward.5} parent=23 // pred_region
        %p166 = scmp.lt.s32.totalorder %s10, 1
        %s167 = scalar_select %p166, %s10, 1
        %s168 = smul.addr %s167, 3
        %s169 = smul.addr %s168, 4
        %s170 = scalar_lea.vmem %s1, %s169
      $region32: #{residual_block_forward.5} parent=23 // pred_fallthru
        _
    $region24: #{residual_block_forward.5} parent=5 // pred_fallthru
      _
    %p171 = scmp.le.s32.totalorder 1, %s10
    %p172 = scmp.lt.s32.totalorder %s10, 3
    %p173 = pnand %p171, %p172
    %p174 = pneg %p173
    // Predicated region
    $region33: #{residual_block_forward.5} parent=5 // pred_check
      _
    $region34: #{residual_block_forward.5} parent=5 // pred_check_branch
      %176 = sbr.rel (%p173) target = $region36
    $region35: #{residual_block_forward.5} parent=5 // pred_region
      %s177 = ssub.s32 %s10, 1
      %p178 = scmp.lt.s32.totalorder %s15, 1
      %s179 = scalar_select %p178, %s15, 1
      %s180 = smul.addr %s179, 3
      %s181 = smul.addr %s180, 4
      %s182 = scalar_lea.vmem %s0, %s181
      %p183 = pneg %p36
      %p184 = pneg %p33
      %p185 = scmp.lt.s32.totalorder %s15, 1
      %s186 = scalar_select %p185, %s15, 1
      %s187 = smul.addr %s186, 3
      %s188 = smul.addr %s187, 4
      %s189 = scalar_lea.vmem %s1, %s188
      %p190 = pneg %p62
      %p191 = pneg %p59
      %p192 = pneg %p83
      %p193 = pneg %p80
      %p194 = pneg %p104
      %p195 = pneg %p101
      %p196 = pneg %p130
      %p197 = pneg %p127
      %p198 = scmp.lt.s32.totalorder %s15, 1
      %s199 = scalar_select %p198, %s15, 1
      %s200 = smul.addr %s199, 3
      %s201 = smul.addr %s200, 4
      %s202 = scalar_lea.vmem %s4, %s201
      %p203 = scmp.lt.s32.totalorder %s15, 1
      %s204 = scalar_select %p203, %s15, 1
      %s205 = smul.addr %s204, 3
      %s206 = smul.addr %s205, 4
      %s207 = scalar_lea.vmem %s0, %s206
      %p208 = scmp.lt.s32.totalorder %s15, 1
      %s209 = scalar_select %p208, %s15, 1
      %s210 = smul.addr %s209, 3
      %s211 = smul.addr %s210, 4
      %s212 = scalar_lea.vmem %s1, %s211
      %p213 = scmp.lt.s32.totalorder %s15, 1
      %s214 = scalar_select %p213, %s15, 1
      %s215 = smul.addr %s214, 3
      %s216 = smul.addr %s215, 4
      %s217 = scalar_lea.vmem %s4, %s216
      %v218 = vld [vmem:[%s207] sm:$0xff]
      %v219 = vld [vmem:[%s207 + $0x8] sm:$0xf]
      %v220 = vld [vmem:[%s2] sm:$0xf]
      %222 = vset.pattern.permute.xlu0 0
      %223 = vperm.xlu0 %222, %v220
      %v224 = vpop.permute.xlu0 %223
      %v226 = vunpack.c.l.s4 839922192
      %v227 = vunpack.c.0.s8 %v226
      %v228 = vlaneseq
      %v229 = vshrl.u32 %v228, 7
      %v230 = vsub.s32 %v227, %v229
      %v231 = vrot.slane %v224, %v230
      %v233 = vmul.f32 %v218, %v231
      %v234 = vmul.f32 %v219, %v231
      %v235 = vld [vmem:[%s3] sm:$0xf]
      %237 = vset.pattern.permute.xlu0 0
      %238 = vperm.xlu0 %237, %v235
      %v239 = vpop.permute.xlu0 %238
      %v241 = vunpack.c.l.s4 839922192
      %v242 = vunpack.c.0.s8 %v241
      %v243 = vlaneseq
      %v244 = vshrl.u32 %v243, 7
      %v245 = vsub.s32 %v242, %v244
      %v246 = vrot.slane %v239, %v245
      %v248 = vadd.f32 %v233, %v246
      %v249 = vadd.f32 %v234, %v246
      %v250 = vld [vmem:[%s212] sm:$0xff]
      %v251 = vld [vmem:[%s212 + $0x8] sm:$0xf]
      %v252 = vadd.f32 %v248, %v250
      %v253 = vadd.f32 %v249, %v251
      %v254 = vmax.f32 %v252, 0.0
      %v255 = vmax.f32 %v253, 0.0
      %256 = vst [vmem:[%s217] sm:$0xff] %v254
      %257 = vst [vmem:[%s217 + $0x8] sm:$0xf] %v255
      %p258 = scmp.lt.s32.totalorder %s15, 1
      %s259 = scalar_select %p258, %s15, 1
      %s260 = smul.addr %s259, 3
      %s261 = smul.addr %s260, 4
      %s262 = scalar_lea.vmem %s4, %s261
      // Predicated region
      $region37: #{residual_block_forward.5} parent=35 // pred_check
        %p263 = pneg %p127
      $region38: #{residual_block_forward.5} parent=35 // pred_check_branch
        %265 = sbr.rel (%p263) target = $region40
      $region39: #{residual_block_forward.5} parent=35 // pred_region
        _
      $region40: #{residual_block_forward.5} parent=35 // pred_fallthru
        _
    $region36: #{residual_block_forward.5} parent=5 // pred_fallthru
      _
    %p266 = scmp.le.s32.totalorder 2, %s10
    // Predicated region
    $region41: #{residual_block_forward.5} parent=5 // pred_check
      %p267 = pneg %p266
    $region42: #{residual_block_forward.5} parent=5 // pred_check_branch
      %269 = sbr.rel (%p267) target = $region44
    $region43: #{residual_block_forward.5} parent=5 // pred_region
      %s270 = ssub.s32 %s10, 2
      // Predicated region
      $region45: #{residual_block_forward.5} parent=43 // pred_check
        %p271 = pneg %p133
      $region46: #{residual_block_forward.5} parent=43 // pred_check_branch
        %273 = sbr.rel (%p271) target = $region48
      $region47: #{residual_block_forward.5} parent=43 // pred_region
        %p274 = scmp.lt.s32.totalorder %s16, 1
        %s275 = scalar_select %p274, %s16, 1
        %s276 = smul.addr %s275, 3
        %s277 = smul.addr %s276, 4
        %s278 = scalar_lea.vmem %s4, %s277
      $region48: #{residual_block_forward.5} parent=43 // pred_fallthru
        _
    $region44: #{residual_block_forward.5} parent=5 // pred_fallthru
      _
  $region6: #{residual_block_forward.5} parent=0 // loop_footer
    %s14 = sadd.s32 1, %s10
  $region7: #{residual_block_forward.5} parent=0 // loop_footer_branch
    %9 = sbr.rel target = $region3
  $region8: #{residual_block_forward.5} parent=0 // loop_exit
    _

// kernel: residual_block_forward.3
$region0: #{residual_block_forward.3}
  #allocation0 [shape = 'u32[]', space=smem, size = 0x4, offset = 0x4, fixed_abs, tag = 'smem constant byte address 0x4 - core index']
  #allocation1 [shape = 'u32[144,128]{1,0:T(1,128)}', space=vmem, size = 0x12000, scoped, tag = 'internal scratch']
  #allocation2 [shape = 'f32[36,384]{1,0:T(8,128)}', space=vmem, size = 0xf000, scoped, tag = 'scratch operand']
  %s0 = inlined_call_operand.vmem [shape: f32[2,4,384], index: 0, kind: input, shape index: {}]
  %s1 = inlined_call_operand.vmem [shape: bf16[4,36], index: 1, kind: input, shape index: {}]
  %s2 = inlined_call_operand.vmem [shape: f32[1,384], index: 2, kind: input, shape index: {}]
  %s3 = inlined_call_operand.vmem [shape: f32[4,1], index: 3, kind: input, shape index: {}]
  %s4 = inlined_call_operand.vmem [shape: f32[4,1], index: 4, kind: input, shape index: {}]
  %s5 = inlined_call_operand.vmem [shape: f32[2,4,384], index: 5, kind: output, shape index: {0}]
  %s6 = inlined_call_operand.vmem [shape: f32[2,4,1], index: 6, kind: output, shape index: {1}]
  %s7 = inlined_call_operand.vmem [shape: f32[2,4,1], index: 7, kind: output, shape index: {2}]
  %8 = xla_tuple %s5, %s6, %s7
  %s9 = sld [smem:[#allocation0]]
  $region69: #{residual_block_forward.3} parent=0
    _
  %s11 = ssub.s32 1, %s9
  %s12 = scalar_select 0, %s11, %s9
  loop: start=0, step=1, limit=4
  $region2: #{residual_block_forward.3} parent=0 // loop_pre_header
    _
  $region3: #{residual_block_forward.3} parent=0 // loop_header
    %s14 = sphi 0, %s18
    %p15 = scmp.ge.s32.totalorder %s14, 4
    %s24 = sphi 0, %s26
    %s27 = sphi 0, %s24
    %s28 = sphi 0, %s27
    %s44 = sphi 0, %s28
    %s48 = sphi 0, %s48
    %s50 = sphi 0, %s48
    %s51 = sphi 0, %s50
    %s65 = sphi 0, %s51
    %s69 = sphi 0, %s69
    %s71 = sphi 0, %s69
    %s72 = sphi 0, %s71
    %s86 = sphi 0, %s72
    %s90 = sphi 0, %s90
    %s92 = sphi 0, %s90
    %s93 = sphi 0, %s92
    %s107 = sphi 0, %s93
    %s111 = sphi 0, %s111
    %s113 = sphi 0, %s111
    %s114 = sphi 0, %s113
    %s128 = sphi 0, %s114
    %s134 = sphi 0, %s136
    %s137 = sphi 0, %s134
    %s138 = sphi 0, %s137
    %s154 = sphi 0, %s138
    %s160 = sphi 0, %s162
    %s163 = sphi 0, %s160
    %s164 = sphi 0, %s163
    %s180 = sphi 0, %s164
    %s186 = sphi 0, %s188
    %s189 = sphi 0, %s186
    %s190 = sphi 0, %s189
    %s206 = sphi 0, %s190
  $region4: #{residual_block_forward.3} parent=0 // loop_header_branch
    %17 = sbr.rel (%p15) target = $region8
  $region5: #{residual_block_forward.3} parent=0 // loop_body
    %s19 = ssub.s32 %s14, 1
    %s20 = ssub.s32 %s14, 2
    %s21 = sadd.s32 %s14, 1
    %s22 = ssub.s32 %s14, %s21
    %p23 = scmp.eq.s32.totalorder %s22, 0
    %s25 = sadd.s32 %s24, 1
    %s26 = scalar_select %p23, %s24, %s25
    %p29 = pneg %p23
    %p30 = scmp.eq.s32.totalorder %s14, 1
    %p31 = por %p29, %p30
    %p32 = scmp.ne.s32.totalorder %s24, %s27
    %p33 = scmp.eq.s32.totalorder %s14, 0
    %p34 = por %p32, %p33
    %p35 = scmp.ne.s32.totalorder %s24, %s27
    %p36 = scmp.eq.s32.totalorder %s19, 1
    %p37 = por %p35, %p36
    %p38 = scmp.ne.s32.totalorder %s27, %s28
    %p39 = scmp.eq.s32.totalorder %s19, 0
    %p40 = por %p38, %p39
    %p41 = scmp.ne.s32.totalorder %s27, %s28
    %p42 = scmp.eq.s32.totalorder %s20, 1
    %p43 = por %p41, %p42
    %p45 = scmp.ne.s32.totalorder %s28, %s44
    %p46 = scmp.eq.s32.totalorder %s20, 0
    %p47 = por %p45, %p46
    %s49 = sadd.s32 %s48, 1
    %p52 = scmp.eq.s32.totalorder %s14, 1
    %p53 = scmp.ne.s32.totalorder %s48, %s50
    %p54 = scmp.eq.s32.totalorder %s14, 0
    %p55 = por %p53, %p54
    %p56 = scmp.ne.s32.totalorder %s48, %s50
    %p57 = scmp.eq.s32.totalorder %s19, 1
    %p58 = por %p56, %p57
    %p59 = scmp.ne.s32.totalorder %s50, %s51
    %p60 = scmp.eq.s32.totalorder %s19, 0
    %p61 = por %p59, %p60
    %p62 = scmp.ne.s32.totalorder %s50, %s51
    %p63 = scmp.eq.s32.totalorder %s20, 1
    %p64 = por %p62, %p63
    %p66 = scmp.ne.s32.totalorder %s51, %s65
    %p67 = scmp.eq.s32.totalorder %s20, 0
    %p68 = por %p66, %p67
    %s70 = sadd.s32 %s69, 1
    %p73 = scmp.eq.s32.totalorder %s14, 1
    %p74 = scmp.ne.s32.totalorder %s69, %s71
    %p75 = scmp.eq.s32.totalorder %s14, 0
    %p76 = por %p74, %p75
    %p77 = scmp.ne.s32.totalorder %s69, %s71
    %p78 = scmp.eq.s32.totalorder %s19, 1
    %p79 = por %p77, %p78
    %p80 = scmp.ne.s32.totalorder %s71, %s72
    %p81 = scmp.eq.s32.totalorder %s19, 0
    %p82 = por %p80, %p81
    %p83 = scmp.ne.s32.totalorder %s71, %s72
    %p84 = scmp.eq.s32.totalorder %s20, 1
    %p85 = por %p83, %p84
    %p87 = scmp.ne.s32.totalorder %s72, %s86
    %p88 = scmp.eq.s32.totalorder %s20, 0
    %p89 = por %p87, %p88
    %s91 = sadd.s32 %s90, 1
    %p94 = scmp.eq.s32.totalorder %s14, 1
    %p95 = scmp.ne.s32.totalorder %s90, %s92
    %p96 = scmp.eq.s32.totalorder %s14, 0
    %p97 = por %p95, %p96
    %p98 = scmp.ne.s32.totalorder %s90, %s92
    %p99 = scmp.eq.s32.totalorder %s19, 1
    %p100 = por %p98, %p99
    %p101 = scmp.ne.s32.totalorder %s92, %s93
    %p102 = scmp.eq.s32.totalorder %s19, 0
    %p103 = por %p101, %p102
    %p104 = scmp.ne.s32.totalorder %s92, %s93
    %p105 = scmp.eq.s32.totalorder %s20, 1
    %p106 = por %p104, %p105
    %p108 = scmp.ne.s32.totalorder %s93, %s107
    %p109 = scmp.eq.s32.totalorder %s20, 0
    %p110 = por %p108, %p109
    %s112 = sadd.s32 %s111, 1
    %p115 = scmp.eq.s32.totalorder %s14, 1
    %p116 = scmp.ne.s32.totalorder %s111, %s113
    %p117 = scmp.eq.s32.totalorder %s14, 0
    %p118 = por %p116, %p117
    %p119 = scmp.ne.s32.totalorder %s111, %s113
    %p120 = scmp.eq.s32.totalorder %s19, 1
    %p121 = por %p119, %p120
    %p122 = scmp.ne.s32.totalorder %s113, %s114
    %p123 = scmp.eq.s32.totalorder %s19, 0
    %p124 = por %p122, %p123
    %p125 = scmp.ne.s32.totalorder %s113, %s114
    %p126 = scmp.eq.s32.totalorder %s20, 1
    %p127 = por %p125, %p126
    %p129 = scmp.ne.s32.totalorder %s114, %s128
    %p130 = scmp.eq.s32.totalorder %s20, 0
    %p131 = por %p129, %p130
    %s132 = ssub.s32 %s14, %s21
    %p133 = scmp.eq.s32.totalorder %s132, 0
    %s135 = sadd.s32 %s134, 1
    %s136 = scalar_select %p133, %s134, %s135
    %p139 = pneg %p133
    %p140 = scmp.eq.s32.totalorder %s14, 1
    %p141 = por %p139, %p140
    %p142 = scmp.ne.s32.totalorder %s134, %s137
    %p143 = scmp.eq.s32.totalorder %s14, 0
    %p144 = por %p142, %p143
    %p145 = scmp.ne.s32.totalorder %s134, %s137
    %p146 = scmp.eq.s32.totalorder %s19, 1
    %p147 = por %p145, %p146
    %p148 = scmp.ne.s32.totalorder %s137, %s138
    %p149 = scmp.eq.s32.totalorder %s19, 0
    %p150 = por %p148, %p149
    %p151 = scmp.ne.s32.totalorder %s137, %s138
    %p152 = scmp.eq.s32.totalorder %s20, 1
    %p153 = por %p151, %p152
    %p155 = scmp.ne.s32.totalorder %s138, %s154
    %p156 = scmp.eq.s32.totalorder %s20, 0
    %p157 = por %p155, %p156
    %s158 = ssub.s32 %s14, %s21
    %p159 = scmp.eq.s32.totalorder %s158, 0
    %s161 = sadd.s32 %s160, 1
    %s162 = scalar_select %p159, %s160, %s161
    %p165 = pneg %p159
    %p166 = scmp.eq.s32.totalorder %s14, 1
    %p167 = por %p165, %p166
    %p168 = scmp.ne.s32.totalorder %s160, %s163
    %p169 = scmp.eq.s32.totalorder %s14, 0
    %p170 = por %p168, %p169
    %p171 = scmp.ne.s32.totalorder %s160, %s163
    %p172 = scmp.eq.s32.totalorder %s19, 1
    %p173 = por %p171, %p172
    %p174 = scmp.ne.s32.totalorder %s163, %s164
    %p175 = scmp.eq.s32.totalorder %s19, 0
    %p176 = por %p174, %p175
    %p177 = scmp.ne.s32.totalorder %s163, %s164
    %p178 = scmp.eq.s32.totalorder %s20, 1
    %p179 = por %p177, %p178
    %p181 = scmp.ne.s32.totalorder %s164, %s180
    %p182 = scmp.eq.s32.totalorder %s20, 0
    %p183 = por %p181, %p182
    %s184 = ssub.s32 %s14, %s21
    %p185 = scmp.eq.s32.totalorder %s184, 0
    %s187 = sadd.s32 %s186, 1
    %s188 = scalar_select %p185, %s186, %s187
    %p191 = pneg %p185
    %p192 = scmp.eq.s32.totalorder %s14, 1
    %p193 = por %p191, %p192
    %p194 = scmp.ne.s32.totalorder %s186, %s189
    %p195 = scmp.eq.s32.totalorder %s14, 0
    %p196 = por %p194, %p195
    %p197 = scmp.ne.s32.totalorder %s186, %s189
    %p198 = scmp.eq.s32.totalorder %s19, 1
    %p199 = por %p197, %p198
    %p200 = scmp.ne.s32.totalorder %s189, %s190
    %p201 = scmp.eq.s32.totalorder %s19, 0
    %p202 = por %p200, %p201
    %p203 = scmp.ne.s32.totalorder %s189, %s190
    %p204 = scmp.eq.s32.totalorder %s20, 1
    %p205 = por %p203, %p204
    %p207 = scmp.ne.s32.totalorder %s190, %s206
    %p208 = scmp.eq.s32.totalorder %s20, 0
    %p209 = por %p207, %p208
    %p210 = scmp.le.s32.totalorder 1, %s14
    %p211 = scmp.lt.s32.totalorder %s14, 3
    %p212 = pnand %p210, %p211
    %p213 = pneg %p212
    // Predicated region
    $region9: #{residual_block_forward.3} parent=5 // pred_check
      _
    $region10: #{residual_block_forward.3} parent=5 // pred_check_branch
      %215 = sbr.rel (%p212) target = $region12
    $region11: #{residual_block_forward.3} parent=5 // pred_region
      %s216 = ssub.s32 %s14, 1
      // Predicated region
      $region13: #{residual_block_forward.3} parent=11 // pred_check
        %p217 = pneg %p61
      $region14: #{residual_block_forward.3} parent=11 // pred_check_branch
        %219 = sbr.rel (%p217) target = $region16
      $region15: #{residual_block_forward.3} parent=11 // pred_region
        _
      $region16: #{residual_block_forward.3} parent=11 // pred_fallthru
        _
      // Predicated region
      $region17: #{residual_block_forward.3} parent=11 // pred_check
        %p220 = pneg %p82
      $region18: #{residual_block_forward.3} parent=11 // pred_check_branch
        %222 = sbr.rel (%p220) target = $region20
      $region19: #{residual_block_forward.3} parent=11 // pred_region
        _
      $region20: #{residual_block_forward.3} parent=11 // pred_fallthru
        _
      // Predicated region
      $region21: #{residual_block_forward.3} parent=11 // pred_check
        %p223 = pneg %p103
      $region22: #{residual_block_forward.3} parent=11 // pred_check_branch
        %225 = sbr.rel (%p223) target = $region24
      $region23: #{residual_block_forward.3} parent=11 // pred_region
        _
      $region24: #{residual_block_forward.3} parent=11 // pred_fallthru
        _
      // Predicated region
      $region25: #{residual_block_forward.3} parent=11 // pred_check
        %p226 = pneg %p124
      $region26: #{residual_block_forward.3} parent=11 // pred_check_branch
        %228 = sbr.rel (%p226) target = $region28
      $region27: #{residual_block_forward.3} parent=11 // pred_region
        _
      $region28: #{residual_block_forward.3} parent=11 // pred_fallthru
        _
    $region12: #{residual_block_forward.3} parent=5 // pred_fallthru
      _
    %p229 = scmp.lt.s32.totalorder %s14, 2
    // Predicated region
    $region29: #{residual_block_forward.3} parent=5 // pred_check
      %p230 = pneg %p229
    $region30: #{residual_block_forward.3} parent=5 // pred_check_branch
      %232 = sbr.rel (%p230) target = $region32
    $region31: #{residual_block_forward.3} parent=5 // pred_region
      // Predicated region
      $region33: #{residual_block_forward.3} parent=31 // pred_check
        %p233 = pneg %p34
      $region34: #{residual_block_forward.3} parent=31 // pred_check_branch
        %235 = sbr.rel (%p233) target = $region36
      $region35: #{residual_block_forward.3} parent=31 // pred_region
        %p236 = scmp.lt.s32.totalorder %s14, 1
        %s237 = scalar_select %p236, %s14, 1
        %s238 = smul.addr %s237, 3
        %s239 = smul.addr %s238, 4
        %s240 = scalar_lea.vmem %s0, %s239
      $region36: #{residual_block_forward.3} parent=31 // pred_fallthru
        _
    $region32: #{residual_block_forward.3} parent=5 // pred_fallthru
      _
    %p241 = scmp.le.s32.totalorder 1, %s14
    %p242 = scmp.lt.s32.totalorder %s14, 3
    %p243 = pnand %p241, %p242
    %p244 = pneg %p243
    // Predicated region
    $region37: #{residual_block_forward.3} parent=5 // pred_check
      _
    $region38: #{residual_block_forward.3} parent=5 // pred_check_branch
      %246 = sbr.rel (%p243) target = $region40
    $region39: #{residual_block_forward.3} parent=5 // pred_region
      %s247 = ssub.s32 %s14, 1
      %p248 = scmp.lt.s32.totalorder %s19, 1
      %s249 = scalar_select %p248, %s19, 1
      %s250 = smul.addr %s249, 3
      %s251 = smul.addr %s250, 4
      %s252 = scalar_lea.vmem %s0, %s251
      %p253 = pneg %p40
      %p254 = pneg %p37
      %p255 = pneg %p61
      %p256 = pneg %p58
      %p257 = pneg %p82
      %p258 = pneg %p79
      %p259 = pneg %p103
      %p260 = pneg %p100
      %p261 = pneg %p124
      %p262 = pneg %p121
      %p263 = pneg %p150
      %p264 = pneg %p147
      %p265 = scmp.lt.s32.totalorder %s19, 1
      %s266 = scalar_select %p265, %s19, 1
      %s267 = smul.addr %s266, 3
      %s268 = smul.addr %s267, 4
      %s269 = scalar_lea.vmem %s5, %s268
      %p270 = pneg %p176
      %p271 = pneg %p173
      %p272 = scmp.lt.s32.totalorder %s19, 1
      %s273 = scalar_select %p272, %s19, 1
      %s274 = smul.addr %s273, 4
      %s275 = scalar_lea.vmem %s6, %s274
      %p276 = pneg %p202
      %p277 = pneg %p199
      %p278 = scmp.lt.s32.totalorder %s19, 1
      %s279 = scalar_select %p278, %s19, 1
      %s280 = smul.addr %s279, 4
      %s281 = scalar_lea.vmem %s7, %s280
      %p282 = scmp.lt.s32.totalorder %s19, 1
      %s283 = scalar_select %p282, %s19, 1
      %s284 = smul.addr %s283, 3
      %s285 = smul.addr %s284, 4
      %s286 = scalar_lea.vmem %s0, %s285
      %p287 = scmp.lt.s32.totalorder %s19, 1
      %s288 = scalar_select %p287, %s19, 1
      %s289 = smul.addr %s288, 3
      %s290 = smul.addr %s289, 4
      %s291 = scalar_lea.vmem %s5, %s290
      %p292 = scmp.lt.s32.totalorder %s19, 1
      %s293 = scalar_select %p292, %s19, 1
      %s294 = smul.addr %s293, 4
      %s295 = scalar_lea.vmem %s6, %s294
      %p296 = scmp.lt.s32.totalorder %s19, 1
      %s297 = scalar_select %p296, %s19, 1
      %s298 = smul.addr %s297, 4
      %s299 = scalar_lea.vmem %s7, %s298
      %v301 = vld [vmem:[%s286] sm:$0xff]
      %v302 = vld [vmem:[%s286 + $0x8] sm:$0xf]
      %v303 = vld [vmem:[%s2] sm:$0x7]
      %v305 = vcombine.high %v301, %v301
      %307 = vrot.lane.b32.xlu0 %v301, 19
      %v308 = vpop.permute.xlu0 %307
      %309 = vrot.lane.b32.xlu0 %v305, 19
      %v310 = vpop.permute.xlu0 %309
      %311 = vrot.lane.b32.xlu0 %v302, 19
      %v312 = vpop.permute.xlu0 %311
      %v313 = vlaneseq
      %v314 = vand.u32 %v313, 127
      %vm315 = vcmp.lt.s32.totalorder %v314, 19
      %v316 = vsel %vm315, %v310, %v312
      %v317 = vsel %vm315, %v308, %v310
      %v318 = vsel %vm315, %v312, %v308
      %319 = vst [vmem:[#allocation2] sm:$0xf] %v318
      %320 = vst [vmem:[#allocation2 + $0x8] sm:$0xf] %v317
      %321 = vst [vmem:[#allocation2 + $0x10] sm:$0xf] %v316
      %322 = vrot.lane.b32.xlu0 %v301, 18
      %v323 = vpop.permute.xlu0 %322
      %324 = vrot.lane.b32.xlu0 %v305, 18
      %v325 = vpop.permute.xlu0 %324
      %326 = vrot.lane.b32.xlu0 %v302, 18
      %v327 = vpop.permute.xlu0 %326
      %vm328 = vcmp.lt.s32.totalorder %v314, 18
      %v329 = vsel %vm328, %v325, %v327
      %v330 = vsel %vm328, %v323, %v325
      %v331 = vsel %vm328, %v327, %v323
      %v335 = vrot.slane %v331, 4
      %v336 = vrot.slane %v330, 4
      %v337 = vrot.slane %v329, 4
      %341 = vst [vmem:[#allocation2] sm:$0xf0] %v335
      %342 = vst [vmem:[#allocation2 + $0x8] sm:$0xf0] %v336
      %343 = vst [vmem:[#allocation2 + $0x10] sm:$0xf0] %v337
      %344 = vrot.lane.b32.xlu0 %v301, 17
      %v345 = vpop.permute.xlu0 %344
      %346 = vrot.lane.b32.xlu0 %v305, 17
      %v347 = vpop.permute.xlu0 %346
      %348 = vrot.lane.b32.xlu0 %v302, 17
      %v349 = vpop.permute.xlu0 %348
      %vm350 = vcmp.lt.s32.totalorder %v314, 17
      %v351 = vsel %vm350, %v347, %v349
      %v352 = vsel %vm350, %v345, %v347
      %v353 = vsel %vm350, %v349, %v345
      %354 = vst [vmem:[#allocation2 + $0x18] sm:$0xf] %v353
      %355 = vst [vmem:[#allocation2 + $0x20] sm:$0xf] %v352
      %356 = vst [vmem:[#allocation2 + $0x28] sm:$0xf] %v351
      %357 = vrot.lane.b32.xlu0 %v301, 1
      %v358 = vpop.permute.xlu0 %357
      %359 = vrot.lane.b32.xlu0 %v305, 1
      %v360 = vpop.permute.xlu0 %359
      %361 = vrot.lane.b32.xlu0 %v302, 1
      %v362 = vpop.permute.xlu0 %361
      %vm363 = vcmp.lt.s32.totalorder %v314, 1
      %v364 = vsel %vm363, %v360, %v362
      %v365 = vsel %vm363, %v358, %v360
      %v366 = vsel %vm363, %v362, %v358
      %v370 = vrot.slane %v366, 4
      %v371 = vrot.slane %v365, 4
      %v372 = vrot.slane %v364, 4
      %376 = vst [vmem:[#allocation2 + $0x18] sm:$0xf0] %v370
      %377 = vst [vmem:[#allocation2 + $0x20] sm:$0xf0] %v371
      %378 = vst [vmem:[#allocation2 + $0x28] sm:$0xf0] %v372
      %379 = vst [vmem:[#allocation2 + $0x30] sm:$0xf] %v301
      %380 = vst [vmem:[#allocation2 + $0x38] sm:$0xf] %v305
      %381 = vst [vmem:[#allocation2 + $0x40] sm:$0xf] %v302
      %382 = vrot.lane.b32.xlu0 %v301, 127
      %v383 = vpop.permute.xlu0 %382
      %384 = vrot.lane.b32.xlu0 %v305, 127
      %v385 = vpop.permute.xlu0 %384
      %386 = vrot.lane.b32.xlu0 %v302, 127
      %v387 = vpop.permute.xlu0 %386
      %vm388 = vcmp.lt.s32.totalorder %v314, 127
      %v389 = vsel %vm388, %v385, %v387
      %v390 = vsel %vm388, %v383, %v385
      %v391 = vsel %vm388, %v387, %v383
      %v395 = vrot.slane %v390, 4
      %v396 = vrot.slane %v389, 4
      %v397 = vrot.slane %v391, 4
      %401 = vst [vmem:[#allocation2 + $0x30] sm:$0xf0] %v395
      %402 = vst [vmem:[#allocation2 + $0x38] sm:$0xf0] %v396
      %403 = vst [vmem:[#allocation2 + $0x40] sm:$0xf0] %v397
      %404 = vrot.lane.b32.xlu0 %v301, 111
      %v405 = vpop.permute.xlu0 %404
      %406 = vrot.lane.b32.xlu0 %v305, 111
      %v407 = vpop.permute.xlu0 %406
      %408 = vrot.lane.b32.xlu0 %v302, 111
      %v409 = vpop.permute.xlu0 %408
      %vm410 = vcmp.lt.s32.totalorder %v314, 111
      %v411 = vsel %vm410, %v407, %v409
      %v412 = vsel %vm410, %v405, %v407
      %v413 = vsel %vm410, %v409, %v405
      %414 = vst [vmem:[#allocation2 + $0x48] sm:$0xf] %v412
      %415 = vst [vmem:[#allocation2 + $0x50] sm:$0xf] %v411
      %416 = vst [vmem:[#allocation2 + $0x58] sm:$0xf] %v413
      %417 = vrot.lane.b32.xlu0 %v301, 110
      %v418 = vpop.permute.xlu0 %417
      %419 = vrot.lane.b32.xlu0 %v305, 110
      %v420 = vpop.permute.xlu0 %419
      %421 = vrot.lane.b32.xlu0 %v302, 110
      %v422 = vpop.permute.xlu0 %421
      %vm423 = vcmp.lt.s32.totalorder %v314, 110
      %v424 = vsel %vm423, %v420, %v422
      %v425 = vsel %vm423, %v418, %v420
      %v426 = vsel %vm423, %v422, %v418
      %v430 = vrot.slane %v425, 4
      %v431 = vrot.slane %v424, 4
      %v432 = vrot.slane %v426, 4
      %436 = vst [vmem:[#allocation2 + $0x48] sm:$0xf0] %v430
      %437 = vst [vmem:[#allocation2 + $0x50] sm:$0xf0] %v431
      %438 = vst [vmem:[#allocation2 + $0x58] sm:$0xf0] %v432
      %439 = vrot.lane.b32.xlu0 %v301, 109
      %v440 = vpop.permute.xlu0 %439
      %441 = vrot.lane.b32.xlu0 %v305, 109
      %v442 = vpop.permute.xlu0 %441
      %443 = vrot.lane.b32.xlu0 %v302, 109
      %v444 = vpop.permute.xlu0 %443
      %vm445 = vcmp.lt.s32.totalorder %v314, 109
      %v446 = vsel %vm445, %v442, %v444
      %v447 = vsel %vm445, %v440, %v442
      %v448 = vsel %vm445, %v444, %v440
      %449 = vst [vmem:[#allocation2 + $0x60] sm:$0xf] %v447
      %450 = vst [vmem:[#allocation2 + $0x68] sm:$0xf] %v446
      %451 = vst [vmem:[#allocation2 + $0x70] sm:$0xf] %v448
      %v452 = vld [vmem:[%s1] sm:$0x3]
      %v453 = vld [vmem:[#allocation2] sm:$0xff]
      %v454 = vld [vmem:[#allocation2 + $0x8] sm:$0xff]
      %v455 = vld [vmem:[#allocation2 + $0x10] sm:$0xff]
      %v456 = vld [vmem:[#allocation2 + $0x18] sm:$0xff]
      %v457 = vld [vmem:[#allocation2 + $0x20] sm:$0xff]
      %v458 = vld [vmem:[#allocation2 + $0x28] sm:$0xff]
      %v459 = vld [vmem:[#allocation2 + $0x30] sm:$0xff]
      %v460 = vld [vmem:[#allocation2 + $0x38] sm:$0xff]
      %v461 = vld [vmem:[#allocation2 + $0x40] sm:$0xff]
      %v462 = vld [vmem:[#allocation2 + $0x48] sm:$0xff]
      %v463 = vld [vmem:[#allocation2 + $0x50] sm:$0xff]
      %v464 = vld [vmem:[#allocation2 + $0x58] sm:$0xff]
      %v465 = vld [vmem:[#allocation2 + $0x60] sm:$0xf]
      %v466 = vld [vmem:[#allocation2 + $0x68] sm:$0xf]
      %v467 = vld [vmem:[#allocation2 + $0x70] sm:$0xf]
      %v468 = vpack.c.bf16 %v456, %v453
      %v469 = vpack.c.bf16 %v457, %v454
      %v470 = vpack.c.bf16 %v458, %v455
      %v471 = vpack.c.bf16 %v462, %v459
      %v472 = vpack.c.bf16 %v463, %v460
      %v473 = vpack.c.bf16 %v464, %v461
      %v474 = vpack.c.bf16 %v465, %v465
      %v475 = vpack.c.bf16 %v466, %v466
      %v476 = vpack.c.bf16 %v467, %v467
      %vm477 = vcmask 293888
      %v479 = vsel %vm477, %v452, 0
      %vm481 = vcmask 1041408
      %v483 = vsel %vm481, %v474, 0
      %v486 = vsel %vm481, %v475, 0
      %v489 = vsel %vm481, %v476, 0
      %491 = vmatprep.subr.bf16.mxu0 %v469
      %492 = vmatpush1.bf16.msra.mxu0 %v468
      %493 = vmatprep.subr.bf16.mxu0 %v472
      %494 = vmatpush1.bf16.msra.mxu0 %v471
      %495 = vmatprep.subr.bf16.mxu0 %v486
      %496 = vmatpush1.bf16.msra.mxu0 %v483
      %497 = vmatprep.subr.bf16.mxu0 0
      %498 = vmatpush1.bf16.msra.mxu0 0
      %499 = vmatprep.subr.bf16.mxu0 0
      %500 = vmatpush1.bf16.msra.mxu0 0
      %501 = vmatprep.subr.bf16.mxu0 0
      %502 = vmatpush1.bf16.msra.mxu0 0
      %503 = vmatprep.subr.bf16.mxu0 0
      %504 = vmatpush1.bf16.msra.mxu0 0
      %505 = vmatprep.subr.bf16.mxu0 0
      %506 = vmatpush1.bf16.msra.mxu0 0
      %507 = vmatprep.subr.bf16.mxu0 0
      %508 = vmatpush1.bf16.msra.mxu0 0
      %509 = vmatprep.subr.bf16.mxu0 0
      %510 = vmatpush1.bf16.msra.mxu0 0
      %511 = vmatprep.subr.bf16.mxu0 0
      %512 = vmatpush1.bf16.msra.mxu0 0
      %513 = vmatprep.subr.bf16.mxu0 0
      %514 = vmatpush1.bf16.msra.mxu0 0
      %515 = vmatprep.subr.bf16.mxu0 0
      %516 = vmatpush1.bf16.msra.mxu0 0
      %517 = vmatprep.subr.bf16.mxu0 0
      %518 = vmatpush1.bf16.msra.mxu0 0
      %519 = vmatprep.subr.bf16.mxu0 0
      %520 = vmatpush1.bf16.msra.mxu0 0
      %521 = vmatprep.subr.bf16.mxu0 0
      %522 = vmatpush1.bf16.msra.mxu0 0
      %523 = vmatprep.mubr.bf16.mxu0 0
      %524 = vmatmul.mubr.bf16.gmra.mrb[0].mxu0 %v479
      %v525 = vpop.f32.mrb[0].mxu0
      %v526 = vadd.f32 0.0, %v525
      %v527 = vpop.f32.mrb[0].mxu0
      %v528 = vadd.f32 0.0, %v527
      %v529 = vpop.f32.mrb[0].mxu0
      %v530 = vpop.f32.mrb[0].mxu0
      %531 = vdwg.mxu0
      %532 = vmatprep.subr.bf16.mxu0 0
      %533 = vmatpush1.bf16.msra.mxu0 %v470
      %534 = vmatprep.subr.bf16.mxu0 0
      %535 = vmatpush1.bf16.msra.mxu0 %v473
      %536 = vmatprep.subr.bf16.mxu0 0
      %537 = vmatpush1.bf16.msra.mxu0 %v489
      %538 = vmatprep.subr.bf16.mxu0 0
      %539 = vmatpush1.bf16.msra.mxu0 0
      %540 = vmatprep.subr.bf16.mxu0 0
      %541 = vmatpush1.bf16.msra.mxu0 0
      %542 = vmatprep.subr.bf16.mxu0 0
      %543 = vmatpush1.bf16.msra.mxu0 0
      %544 = vmatprep.subr.bf16.mxu0 0
      %545 = vmatpush1.bf16.msra.mxu0 0
      %546 = vmatprep.subr.bf16.mxu0 0
      %547 = vmatpush1.bf16.msra.mxu0 0
      %548 = vmatprep.subr.bf16.mxu0 0
      %549 = vmatpush1.bf16.msra.mxu0 0
      %550 = vmatprep.subr.bf16.mxu0 0
      %551 = vmatpush1.bf16.msra.mxu0 0
      %552 = vmatprep.subr.bf16.mxu0 0
      %553 = vmatpush1.bf16.msra.mxu0 0
      %554 = vmatprep.subr.bf16.mxu0 0
      %555 = vmatpush1.bf16.msra.mxu0 0
      %556 = vmatprep.subr.bf16.mxu0 0
      %557 = vmatpush1.bf16.msra.mxu0 0
      %558 = vmatprep.subr.bf16.mxu0 0
      %559 = vmatpush1.bf16.msra.mxu0 0
      %560 = vmatprep.subr.bf16.mxu0 0
      %561 = vmatpush1.bf16.msra.mxu0 0
      %562 = vmatprep.subr.bf16.mxu0 0
      %563 = vmatpush1.bf16.msra.mxu0 0
      %564 = vmatprep.mubr.bf16.mxu0 0
      %565 = vmatmul.mubr.bf16.gmra.mrb[0].mxu0 %v479
      %v566 = vpop.f32.mrb[0].mxu0
      %v567 = vadd.f32 0.0, %v566
      %v568 = vpop.f32.mrb[0].mxu0
      %v569 = vpop.f32.mrb[0].mxu0
      %v570 = vpop.f32.mrb[0].mxu0
      %571 = vdwg.mxu0
      %v574 = vcombine.low %v526, %v528
      %576 = vst [vmem:[%s291] sm:$0xff] %v574
      %577 = vst [vmem:[%s291 + $0x8] sm:$0xf] %v567
      %v579 = vlaneseq
      %v580 = vshrl.u32 %v579, 7
      %v581 = vsub.s32 0, %v580
      %v582 = vrot.slane %v303, %v581
      %v583 = vlaneseq
      %v584 = vshrl.u32 %v583, 7
      %v585 = vsub.s32 1, %v584
      %v586 = vrot.slane %v303, %v585
      %v587 = vlaneseq
      %v588 = vshrl.u32 %v587, 7
      %v589 = vsub.s32 2, %v588
      %v590 = vrot.slane %v303, %v589
      %v594 = vmul.f32 %v526, %v582
      %v595 = vmul.f32 %v528, %v586
      %v596 = vmul.f32 %v567, %v590
      %vm597 = vcmask 1043456
      %v598 = vsel %vm597, %v594, 0.0
      %v599 = vsel %vm597, %v595, 0.0
      %v600 = vadd.f32 %v598, %v599
      %v601 = vsel %vm597, %v596, 0.0
      %v602 = vadd.f32 %v600, %v601
      %603 = vadd.xlane.f32.xlu0 %v602
      %v604 = vpop.xlane.xlu0 %603
      %vm605 = vcmask 3072
      %606 = vst.msk [vmem:[%s295] sm:$0xf] %vm605, %v604
      %v607 = vmul.f32 %v594, %v594
      %v608 = vmul.f32 %v595, %v595
      %v609 = vmul.f32 %v596, %v596
      %v610 = vsel %vm597, %v607, 0.0
      %v611 = vsel %vm597, %v608, 0.0
      %v612 = vadd.f32 %v610, %v611
      %v613 = vsel %vm597, %v609, 0.0
      %v614 = vadd.f32 %v612, %v613
      %615 = vadd.xlane.f32.xlu0 %v614
      %v616 = vpop.xlane.xlu0 %615
      %617 = vst.msk [vmem:[%s299] sm:$0xf] %vm605, %v616
      %p618 = scmp.lt.s32.totalorder %s19, 1
      %s619 = scalar_select %p618, %s19, 1
      %s620 = smul.addr %s619, 3
      %s621 = smul.addr %s620, 4
      %s622 = scalar_lea.vmem %s5, %s621
      %p623 = scmp.lt.s32.totalorder %s19, 1
      %s624 = scalar_select %p623, %s19, 1
      %s625 = smul.addr %s624, 4
      %s626 = scalar_lea.vmem %s6, %s625
      %p627 = scmp.lt.s32.totalorder %s19, 1
      %s628 = scalar_select %p627, %s19, 1
      %s629 = smul.addr %s628, 4
      %s630 = scalar_lea.vmem %s7, %s629
      // Predicated region
      $region41: #{residual_block_forward.3} parent=39 // pred_check
        %p631 = pneg %p147
      $region42: #{residual_block_forward.3} parent=39 // pred_check_branch
        %633 = sbr.rel (%p631) target = $region44
      $region43: #{residual_block_forward.3} parent=39 // pred_region
        _
      $region44: #{residual_block_forward.3} parent=39 // pred_fallthru
        _
      // Predicated region
      $region45: #{residual_block_forward.3} parent=39 // pred_check
        %p634 = pneg %p173
      $region46: #{residual_block_forward.3} parent=39 // pred_check_branch
        %636 = sbr.rel (%p634) target = $region48
      $region47: #{residual_block_forward.3} parent=39 // pred_region
        _
      $region48: #{residual_block_forward.3} parent=39 // pred_fallthru
        _
      // Predicated region
      $region49: #{residual_block_forward.3} parent=39 // pred_check
        %p637 = pneg %p199
      $region50: #{residual_block_forward.3} parent=39 // pred_check_branch
        %639 = sbr.rel (%p637) target = $region52
      $region51: #{residual_block_forward.3} parent=39 // pred_region
        _
      $region52: #{residual_block_forward.3} parent=39 // pred_fallthru
        _
    $region40: #{residual_block_forward.3} parent=5 // pred_fallthru
      _
    %p640 = scmp.le.s32.totalorder 2, %s14
    // Predicated region
    $region53: #{residual_block_forward.3} parent=5 // pred_check
      %p641 = pneg %p640
    $region54: #{residual_block_forward.3} parent=5 // pred_check_branch
      %643 = sbr.rel (%p641) target = $region56
    $region55: #{residual_block_forward.3} parent=5 // pred_region
      %s644 = ssub.s32 %s14, 2
      // Predicated region
      $region57: #{residual_block_forward.3} parent=55 // pred_check
        %p645 = pneg %p153
      $region58: #{residual_block_forward.3} parent=55 // pred_check_branch
        %647 = sbr.rel (%p645) target = $region60
      $region59: #{residual_block_forward.3} parent=55 // pred_region
        %p648 = scmp.lt.s32.totalorder %s20, 1
        %s649 = scalar_select %p648, %s20, 1
        %s650 = smul.addr %s649, 3
        %s651 = smul.addr %s650, 4
        %s652 = scalar_lea.vmem %s5, %s651
      $region60: #{residual_block_forward.3} parent=55 // pred_fallthru
        _
      // Predicated region
      $region61: #{residual_block_forward.3} parent=55 // pred_check
        %p653 = pneg %p179
      $region62: #{residual_block_forward.3} parent=55 // pred_check_branch
        %655 = sbr.rel (%p653) target = $region64
      $region63: #{residual_block_forward.3} parent=55 // pred_region
        %p656 = scmp.lt.s32.totalorder %s20, 1
        %s657 = scalar_select %p656, %s20, 1
        %s658 = smul.addr %s657, 4
        %s659 = scalar_lea.vmem %s6, %s658
      $region64: #{residual_block_forward.3} parent=55 // pred_fallthru
        _
      // Predicated region
      $region65: #{residual_block_forward.3} parent=55 // pred_check
        %p660 = pneg %p205
      $region66: #{residual_block_forward.3} parent=55 // pred_check_branch
        %662 = sbr.rel (%p660) target = $region68
      $region67: #{residual_block_forward.3} parent=55 // pred_region
        %p663 = scmp.lt.s32.totalorder %s20, 1
        %s664 = scalar_select %p663, %s20, 1
        %s665 = smul.addr %s664, 4
        %s666 = scalar_lea.vmem %s7, %s665
      $region68: #{residual_block_forward.3} parent=55 // pred_fallthru
        _
    $region56: #{residual_block_forward.3} parent=5 // pred_fallthru
      _
  $region6: #{residual_block_forward.3} parent=0 // loop_footer
    %s18 = sadd.s32 1, %s14
  $region7: #{residual_block_forward.3} parent=0 // loop_footer_branch
    %13 = sbr.rel target = $region3
  $region8: #{residual_block_forward.3} parent=0 // loop_exit
    _

// kernel: residual_block_forward.4
$region0: #{residual_block_forward.4}
  #allocation0 [shape = 'u32[]', space=smem, size = 0x4, offset = 0x4, fixed_abs, tag = 'smem constant byte address 0x4 - core index']
  #allocation1 [shape = 'u32[144,128]{1,0:T(1,128)}', space=vmem, size = 0x12000, scoped, tag = 'internal scratch']
  #allocation2 [shape = 'f32[36,384]{1,0:T(8,128)}', space=vmem, size = 0xf000, scoped, tag = 'scratch operand']
  %s0 = inlined_call_operand.vmem [shape: f32[2,4,384], index: 0, kind: input, shape index: {}]
  %s1 = inlined_call_operand.vmem [shape: bf16[4,36], index: 1, kind: input, shape index: {}]
  %s2 = inlined_call_operand.vmem [shape: f32[1,384], index: 2, kind: input, shape index: {}]
  %s3 = inlined_call_operand.vmem [shape: f32[4,1], index: 3, kind: input, shape index: {}]
  %s4 = inlined_call_operand.vmem [shape: f32[4,1], index: 4, kind: input, shape index: {}]
  %s5 = inlined_call_operand.vmem [shape: f32[2,4,384], index: 5, kind: output, shape index: {0}]
  %s6 = inlined_call_operand.vmem [shape: f32[2,4,1], index: 6, kind: output, shape index: {1}]
  %s7 = inlined_call_operand.vmem [shape: f32[2,4,1], index: 7, kind: output, shape index: {2}]
  %8 = xla_tuple %s5, %s6, %s7
  %s9 = sld [smem:[#allocation0]]
  $region69: #{residual_block_forward.4} parent=0
    _
  %s11 = ssub.s32 1, %s9
  %s12 = scalar_select 0, %s11, %s9
  loop: start=0, step=1, limit=4
  $region2: #{residual_block_forward.4} parent=0 // loop_pre_header
    _
  $region3: #{residual_block_forward.4} parent=0 // loop_header
    %s14 = sphi 0, %s18
    %p15 = scmp.ge.s32.totalorder %s14, 4
    %s24 = sphi 0, %s26
    %s27 = sphi 0, %s24
    %s28 = sphi 0, %s27
    %s44 = sphi 0, %s28
    %s48 = sphi 0, %s48
    %s50 = sphi 0, %s48
    %s51 = sphi 0, %s50
    %s65 = sphi 0, %s51
    %s69 = sphi 0, %s69
    %s71 = sphi 0, %s69
    %s72 = sphi 0, %s71
    %s86 = sphi 0, %s72
    %s90 = sphi 0, %s90
    %s92 = sphi 0, %s90
    %s93 = sphi 0, %s92
    %s107 = sphi 0, %s93
    %s111 = sphi 0, %s111
    %s113 = sphi 0, %s111
    %s114 = sphi 0, %s113
    %s128 = sphi 0, %s114
    %s134 = sphi 0, %s136
    %s137 = sphi 0, %s134
    %s138 = sphi 0, %s137
    %s154 = sphi 0, %s138
    %s160 = sphi 0, %s162
    %s163 = sphi 0, %s160
    %s164 = sphi 0, %s163
    %s180 = sphi 0, %s164
    %s186 = sphi 0, %s188
    %s189 = sphi 0, %s186
    %s190 = sphi 0, %s189
    %s206 = sphi 0, %s190
  $region4: #{residual_block_forward.4} parent=0 // loop_header_branch
    %17 = sbr.rel (%p15) target = $region8
  $region5: #{residual_block_forward.4} parent=0 // loop_body
    %s19 = ssub.s32 %s14, 1
    %s20 = ssub.s32 %s14, 2
    %s21 = sadd.s32 %s14, 1
    %s22 = ssub.s32 %s14, %s21
    %p23 = scmp.eq.s32.totalorder %s22, 0
    %s25 = sadd.s32 %s24, 1
    %s26 = scalar_select %p23, %s24, %s25
    %p29 = pneg %p23
    %p30 = scmp.eq.s32.totalorder %s14, 1
    %p31 = por %p29, %p30
    %p32 = scmp.ne.s32.totalorder %s24, %s27
    %p33 = scmp.eq.s32.totalorder %s14, 0
    %p34 = por %p32, %p33
    %p35 = scmp.ne.s32.totalorder %s24, %s27
    %p36 = scmp.eq.s32.totalorder %s19, 1
    %p37 = por %p35, %p36
    %p38 = scmp.ne.s32.totalorder %s27, %s28
    %p39 = scmp.eq.s32.totalorder %s19, 0
    %p40 = por %p38, %p39
    %p41 = scmp.ne.s32.totalorder %s27, %s28
    %p42 = scmp.eq.s32.totalorder %s20, 1
    %p43 = por %p41, %p42
    %p45 = scmp.ne.s32.totalorder %s28, %s44
    %p46 = scmp.eq.s32.totalorder %s20, 0
    %p47 = por %p45, %p46
    %s49 = sadd.s32 %s48, 1
    %p52 = scmp.eq.s32.totalorder %s14, 1
    %p53 = scmp.ne.s32.totalorder %s48, %s50
    %p54 = scmp.eq.s32.totalorder %s14, 0
    %p55 = por %p53, %p54
    %p56 = scmp.ne.s32.totalorder %s48, %s50
    %p57 = scmp.eq.s32.totalorder %s19, 1
    %p58 = por %p56, %p57
    %p59 = scmp.ne.s32.totalorder %s50, %s51
    %p60 = scmp.eq.s32.totalorder %s19, 0
    %p61 = por %p59, %p60
    %p62 = scmp.ne.s32.totalorder %s50, %s51
    %p63 = scmp.eq.s32.totalorder %s20, 1
    %p64 = por %p62, %p63
    %p66 = scmp.ne.s32.totalorder %s51, %s65
    %p67 = scmp.eq.s32.totalorder %s20, 0
    %p68 = por %p66, %p67
    %s70 = sadd.s32 %s69, 1
    %p73 = scmp.eq.s32.totalorder %s14, 1
    %p74 = scmp.ne.s32.totalorder %s69, %s71
    %p75 = scmp.eq.s32.totalorder %s14, 0
    %p76 = por %p74, %p75
    %p77 = scmp.ne.s32.totalorder %s69, %s71
    %p78 = scmp.eq.s32.totalorder %s19, 1
    %p79 = por %p77, %p78
    %p80 = scmp.ne.s32.totalorder %s71, %s72
    %p81 = scmp.eq.s32.totalorder %s19, 0
    %p82 = por %p80, %p81
    %p83 = scmp.ne.s32.totalorder %s71, %s72
    %p84 = scmp.eq.s32.totalorder %s20, 1
    %p85 = por %p83, %p84
    %p87 = scmp.ne.s32.totalorder %s72, %s86
    %p88 = scmp.eq.s32.totalorder %s20, 0
    %p89 = por %p87, %p88
    %s91 = sadd.s32 %s90, 1
    %p94 = scmp.eq.s32.totalorder %s14, 1
    %p95 = scmp.ne.s32.totalorder %s90, %s92
    %p96 = scmp.eq.s32.totalorder %s14, 0
    %p97 = por %p95, %p96
    %p98 = scmp.ne.s32.totalorder %s90, %s92
    %p99 = scmp.eq.s32.totalorder %s19, 1
    %p100 = por %p98, %p99
    %p101 = scmp.ne.s32.totalorder %s92, %s93
    %p102 = scmp.eq.s32.totalorder %s19, 0
    %p103 = por %p101, %p102
    %p104 = scmp.ne.s32.totalorder %s92, %s93
    %p105 = scmp.eq.s32.totalorder %s20, 1
    %p106 = por %p104, %p105
    %p108 = scmp.ne.s32.totalorder %s93, %s107
    %p109 = scmp.eq.s32.totalorder %s20, 0
    %p110 = por %p108, %p109
    %s112 = sadd.s32 %s111, 1
    %p115 = scmp.eq.s32.totalorder %s14, 1
    %p116 = scmp.ne.s32.totalorder %s111, %s113
    %p117 = scmp.eq.s32.totalorder %s14, 0
    %p118 = por %p116, %p117
    %p119 = scmp.ne.s32.totalorder %s111, %s113
    %p120 = scmp.eq.s32.totalorder %s19, 1
    %p121 = por %p119, %p120
    %p122 = scmp.ne.s32.totalorder %s113, %s114
    %p123 = scmp.eq.s32.totalorder %s19, 0
    %p124 = por %p122, %p123
    %p125 = scmp.ne.s32.totalorder %s113, %s114
    %p126 = scmp.eq.s32.totalorder %s20, 1
    %p127 = por %p125, %p126
    %p129 = scmp.ne.s32.totalorder %s114, %s128
    %p130 = scmp.eq.s32.totalorder %s20, 0
    %p131 = por %p129, %p130
    %s132 = ssub.s32 %s14, %s21
    %p133 = scmp.eq.s32.totalorder %s132, 0
    %s135 = sadd.s32 %s134, 1
    %s136 = scalar_select %p133, %s134, %s135
    %p139 = pneg %p133
    %p140 = scmp.eq.s32.totalorder %s14, 1
    %p141 = por %p139, %p140
    %p142 = scmp.ne.s32.totalorder %s134, %s137
    %p143 = scmp.eq.s32.totalorder %s14, 0
    %p144 = por %p142, %p143
    %p145 = scmp.ne.s32.totalorder %s134, %s137
    %p146 = scmp.eq.s32.totalorder %s19, 1
    %p147 = por %p145, %p146
    %p148 = scmp.ne.s32.totalorder %s137, %s138
    %p149 = scmp.eq.s32.totalorder %s19, 0
    %p150 = por %p148, %p149
    %p151 = scmp.ne.s32.totalorder %s137, %s138
    %p152 = scmp.eq.s32.totalorder %s20, 1
    %p153 = por %p151, %p152
    %p155 = scmp.ne.s32.totalorder %s138, %s154
    %p156 = scmp.eq.s32.totalorder %s20, 0
    %p157 = por %p155, %p156
    %s158 = ssub.s32 %s14, %s21
    %p159 = scmp.eq.s32.totalorder %s158, 0
    %s161 = sadd.s32 %s160, 1
    %s162 = scalar_select %p159, %s160, %s161
    %p165 = pneg %p159
    %p166 = scmp.eq.s32.totalorder %s14, 1
    %p167 = por %p165, %p166
    %p168 = scmp.ne.s32.totalorder %s160, %s163
    %p169 = scmp.eq.s32.totalorder %s14, 0
    %p170 = por %p168, %p169
    %p171 = scmp.ne.s32.totalorder %s160, %s163
    %p172 = scmp.eq.s32.totalorder %s19, 1
    %p173 = por %p171, %p172
    %p174 = scmp.ne.s32.totalorder %s163, %s164
    %p175 = scmp.eq.s32.totalorder %s19, 0
    %p176 = por %p174, %p175
    %p177 = scmp.ne.s32.totalorder %s163, %s164
    %p178 = scmp.eq.s32.totalorder %s20, 1
    %p179 = por %p177, %p178
    %p181 = scmp.ne.s32.totalorder %s164, %s180
    %p182 = scmp.eq.s32.totalorder %s20, 0
    %p183 = por %p181, %p182
    %s184 = ssub.s32 %s14, %s21
    %p185 = scmp.eq.s32.totalorder %s184, 0
    %s187 = sadd.s32 %s186, 1
    %s188 = scalar_select %p185, %s186, %s187
    %p191 = pneg %p185
    %p192 = scmp.eq.s32.totalorder %s14, 1
    %p193 = por %p191, %p192
    %p194 = scmp.ne.s32.totalorder %s186, %s189
    %p195 = scmp.eq.s32.totalorder %s14, 0
    %p196 = por %p194, %p195
    %p197 = scmp.ne.s32.totalorder %s186, %s189
    %p198 = scmp.eq.s32.totalorder %s19, 1
    %p199 = por %p197, %p198
    %p200 = scmp.ne.s32.totalorder %s189, %s190
    %p201 = scmp.eq.s32.totalorder %s19, 0
    %p202 = por %p200, %p201
    %p203 = scmp.ne.s32.totalorder %s189, %s190
    %p204 = scmp.eq.s32.totalorder %s20, 1
    %p205 = por %p203, %p204
    %p207 = scmp.ne.s32.totalorder %s190, %s206
    %p208 = scmp.eq.s32.totalorder %s20, 0
    %p209 = por %p207, %p208
    %p210 = scmp.le.s32.totalorder 1, %s14
    %p211 = scmp.lt.s32.totalorder %s14, 3
    %p212 = pnand %p210, %p211
    %p213 = pneg %p212
    // Predicated region
    $region9: #{residual_block_forward.4} parent=5 // pred_check
      _
    $region10: #{residual_block_forward.4} parent=5 // pred_check_branch
      %215 = sbr.rel (%p212) target = $region12
    $region11: #{residual_block_forward.4} parent=5 // pred_region
      %s216 = ssub.s32 %s14, 1
      // Predicated region
      $region13: #{residual_block_forward.4} parent=11 // pred_check
        %p217 = pneg %p61
      $region14: #{residual_block_forward.4} parent=11 // pred_check_branch
        %219 = sbr.rel (%p217) target = $region16
      $region15: #{residual_block_forward.4} parent=11 // pred_region
        _
      $region16: #{residual_block_forward.4} parent=11 // pred_fallthru
        _
      // Predicated region
      $region17: #{residual_block_forward.4} parent=11 // pred_check
        %p220 = pneg %p82
      $region18: #{residual_block_forward.4} parent=11 // pred_check_branch
        %222 = sbr.rel (%p220) target = $region20
      $region19: #{residual_block_forward.4} parent=11 // pred_region
        _
      $region20: #{residual_block_forward.4} parent=11 // pred_fallthru
        _
      // Predicated region
      $region21: #{residual_block_forward.4} parent=11 // pred_check
        %p223 = pneg %p103
      $region22: #{residual_block_forward.4} parent=11 // pred_check_branch
        %225 = sbr.rel (%p223) target = $region24
      $region23: #{residual_block_forward.4} parent=11 // pred_region
        _
      $region24: #{residual_block_forward.4} parent=11 // pred_fallthru
        _
      // Predicated region
      $region25: #{residual_block_forward.4} parent=11 // pred_check
        %p226 = pneg %p124
      $region26: #{residual_block_forward.4} parent=11 // pred_check_branch
        %228 = sbr.rel (%p226) target = $region28
      $region27: #{residual_block_forward.4} parent=11 // pred_region
        _
      $region28: #{residual_block_forward.4} parent=11 // pred_fallthru
        _
    $region12: #{residual_block_forward.4} parent=5 // pred_fallthru
      _
    %p229 = scmp.lt.s32.totalorder %s14, 2
    // Predicated region
    $region29: #{residual_block_forward.4} parent=5 // pred_check
      %p230 = pneg %p229
    $region30: #{residual_block_forward.4} parent=5 // pred_check_branch
      %232 = sbr.rel (%p230) target = $region32
    $region31: #{residual_block_forward.4} parent=5 // pred_region
      // Predicated region
      $region33: #{residual_block_forward.4} parent=31 // pred_check
        %p233 = pneg %p34
      $region34: #{residual_block_forward.4} parent=31 // pred_check_branch
        %235 = sbr.rel (%p233) target = $region36
      $region35: #{residual_block_forward.4} parent=31 // pred_region
        %p236 = scmp.lt.s32.totalorder %s14, 1
        %s237 = scalar_select %p236, %s14, 1
        %s238 = smul.addr %s237, 3
        %s239 = smul.addr %s238, 4
        %s240 = scalar_lea.vmem %s0, %s239
      $region36: #{residual_block_forward.4} parent=31 // pred_fallthru
        _
    $region32: #{residual_block_forward.4} parent=5 // pred_fallthru
      _
    %p241 = scmp.le.s32.totalorder 1, %s14
    %p242 = scmp.lt.s32.totalorder %s14, 3
    %p243 = pnand %p241, %p242
    %p244 = pneg %p243
    // Predicated region
    $region37: #{residual_block_forward.4} parent=5 // pred_check
      _
    $region38: #{residual_block_forward.4} parent=5 // pred_check_branch
      %246 = sbr.rel (%p243) target = $region40
    $region39: #{residual_block_forward.4} parent=5 // pred_region
      %s247 = ssub.s32 %s14, 1
      %p248 = scmp.lt.s32.totalorder %s19, 1
      %s249 = scalar_select %p248, %s19, 1
      %s250 = smul.addr %s249, 3
      %s251 = smul.addr %s250, 4
      %s252 = scalar_lea.vmem %s0, %s251
      %p253 = pneg %p40
      %p254 = pneg %p37
      %p255 = pneg %p61
      %p256 = pneg %p58
      %p257 = pneg %p82
      %p258 = pneg %p79
      %p259 = pneg %p103
      %p260 = pneg %p100
      %p261 = pneg %p124
      %p262 = pneg %p121
      %p263 = pneg %p150
      %p264 = pneg %p147
      %p265 = scmp.lt.s32.totalorder %s19, 1
      %s266 = scalar_select %p265, %s19, 1
      %s267 = smul.addr %s266, 3
      %s268 = smul.addr %s267, 4
      %s269 = scalar_lea.vmem %s5, %s268
      %p270 = pneg %p176
      %p271 = pneg %p173
      %p272 = scmp.lt.s32.totalorder %s19, 1
      %s273 = scalar_select %p272, %s19, 1
      %s274 = smul.addr %s273, 4
      %s275 = scalar_lea.vmem %s6, %s274
      %p276 = pneg %p202
      %p277 = pneg %p199
      %p278 = scmp.lt.s32.totalorder %s19, 1
      %s279 = scalar_select %p278, %s19, 1
      %s280 = smul.addr %s279, 4
      %s281 = scalar_lea.vmem %s7, %s280
      %p282 = scmp.lt.s32.totalorder %s19, 1
      %s283 = scalar_select %p282, %s19, 1
      %s284 = smul.addr %s283, 3
      %s285 = smul.addr %s284, 4
      %s286 = scalar_lea.vmem %s0, %s285
      %p287 = scmp.lt.s32.totalorder %s19, 1
      %s288 = scalar_select %p287, %s19, 1
      %s289 = smul.addr %s288, 3
      %s290 = smul.addr %s289, 4
      %s291 = scalar_lea.vmem %s5, %s290
      %p292 = scmp.lt.s32.totalorder %s19, 1
      %s293 = scalar_select %p292, %s19, 1
      %s294 = smul.addr %s293, 4
      %s295 = scalar_lea.vmem %s6, %s294
      %p296 = scmp.lt.s32.totalorder %s19, 1
      %s297 = scalar_select %p296, %s19, 1
      %s298 = smul.addr %s297, 4
      %s299 = scalar_lea.vmem %s7, %s298
      %v301 = vld [vmem:[%s286] sm:$0xff]
      %v302 = vld [vmem:[%s286 + $0x8] sm:$0xf]
      %v303 = vld [vmem:[%s2] sm:$0x7]
      %v304 = vld [vmem:[%s3] sm:$0xf]
      %306 = vset.pattern.permute.xlu0 0
      %307 = vperm.xlu0 %306, %v304
      %v308 = vpop.permute.xlu0 %307
      %v310 = vunpack.c.l.s4 839922192
      %v311 = vunpack.c.0.s8 %v310
      %v312 = vlaneseq
      %v313 = vshrl.u32 %v312, 7
      %v314 = vsub.s32 %v311, %v313
      %v315 = vrot.slane %v308, %v314
      %v317 = vmul.f32 %v301, %v315
      %v318 = vmul.f32 %v302, %v315
      %v319 = vld [vmem:[%s4] sm:$0xf]
      %321 = vset.pattern.permute.xlu0 0
      %322 = vperm.xlu0 %321, %v319
      %v323 = vpop.permute.xlu0 %322
      %v325 = vunpack.c.l.s4 839922192
      %v326 = vunpack.c.0.s8 %v325
      %v327 = vlaneseq
      %v328 = vshrl.u32 %v327, 7
      %v329 = vsub.s32 %v326, %v328
      %v330 = vrot.slane %v323, %v329
      %v332 = vadd.f32 %v317, %v330
      %v333 = vadd.f32 %v318, %v330
      %v334 = vmax.f32 %v332, 0.0
      %v335 = vmax.f32 %v333, 0.0
      %v337 = vlaneseq
      %v338 = vshrl.u32 %v337, 7
      %v339 = vsub.s32 0, %v338
      %v340 = vrot.slane %v303, %v339
      %v341 = vlaneseq
      %v342 = vshrl.u32 %v341, 7
      %v343 = vsub.s32 1, %v342
      %v344 = vrot.slane %v303, %v343
      %v345 = vlaneseq
      %v346 = vshrl.u32 %v345, 7
      %v347 = vsub.s32 2, %v346
      %v348 = vrot.slane %v303, %v347
      %v352 = vcombine.low %v340, %v344
      %v354 = vmul.f32 %v334, %v352
      %v355 = vmul.f32 %v335, %v348
      %v357 = vcombine.high %v354, %v354
      %359 = vrot.lane.b32.xlu0 %v354, 19
      %v360 = vpop.permute.xlu0 %359
      %361 = vrot.lane.b32.xlu0 %v357, 19
      %v362 = vpop.permute.xlu0 %361
      %363 = vrot.lane.b32.xlu0 %v355, 19
      %v364 = vpop.permute.xlu0 %363
      %v365 = vlaneseq
      %v366 = vand.u32 %v365, 127
      %vm367 = vcmp.lt.s32.totalorder %v366, 19
      %v368 = vsel %vm367, %v362, %v364
      %v369 = vsel %vm367, %v360, %v362
      %v370 = vsel %vm367, %v364, %v360
      %371 = vst [vmem:[#allocation2] sm:$0xf] %v370
      %372 = vst [vmem:[#allocation2 + $0x8] sm:$0xf] %v369
      %373 = vst [vmem:[#allocation2 + $0x10] sm:$0xf] %v368
      %374 = vrot.lane.b32.xlu0 %v354, 18
      %v375 = vpop.permute.xlu0 %374
      %376 = vrot.lane.b32.xlu0 %v357, 18
      %v377 = vpop.permute.xlu0 %376
      %378 = vrot.lane.b32.xlu0 %v355, 18
      %v379 = vpop.permute.xlu0 %378
      %vm380 = vcmp.lt.s32.totalorder %v366, 18
      %v381 = vsel %vm380, %v377, %v379
      %v382 = vsel %vm380, %v375, %v377
      %v383 = vsel %vm380, %v379, %v375
      %v387 = vrot.slane %v383, 4
      %v388 = vrot.slane %v382, 4
      %v389 = vrot.slane %v381, 4
      %393 = vst [vmem:[#allocation2] sm:$0xf0] %v387
      %394 = vst [vmem:[#allocation2 + $0x8] sm:$0xf0] %v388
      %395 = vst [vmem:[#allocation2 + $0x10] sm:$0xf0] %v389
      %396 = vrot.lane.b32.xlu0 %v354, 17
      %v397 = vpop.permute.xlu0 %396
      %398 = vrot.lane.b32.xlu0 %v357, 17
      %v399 = vpop.permute.xlu0 %398
      %400 = vrot.lane.b32.xlu0 %v355, 17
      %v401 = vpop.permute.xlu0 %400
      %vm402 = vcmp.lt.s32.totalorder %v366, 17
      %v403 = vsel %vm402, %v399, %v401
      %v404 = vsel %vm402, %v397, %v399
      %v405 = vsel %vm402, %v401, %v397
      %406 = vst [vmem:[#allocation2 + $0x18] sm:$0xf] %v405
      %407 = vst [vmem:[#allocation2 + $0x20] sm:$0xf] %v404
      %408 = vst [vmem:[#allocation2 + $0x28] sm:$0xf] %v403
      %409 = vrot.lane.b32.xlu0 %v354, 1
      %v410 = vpop.permute.xlu0 %409
      %411 = vrot.lane.b32.xlu0 %v357, 1
      %v412 = vpop.permute.xlu0 %411
      %413 = vrot.lane.b32.xlu0 %v355, 1
      %v414 = vpop.permute.xlu0 %413
      %vm415 = vcmp.lt.s32.totalorder %v366, 1
      %v416 = vsel %vm415, %v412, %v414
      %v417 = vsel %vm415, %v410, %v412
      %v418 = vsel %vm415, %v414, %v410
      %v422 = vrot.slane %v418, 4
      %v423 = vrot.slane %v417, 4
      %v424 = vrot.slane %v416, 4
      %428 = vst [vmem:[#allocation2 + $0x18] sm:$0xf0] %v422
      %429 = vst [vmem:[#allocation2 + $0x20] sm:$0xf0] %v423
      %430 = vst [vmem:[#allocation2 + $0x28] sm:$0xf0] %v424
      %431 = vst [vmem:[#allocation2 + $0x30] sm:$0xf] %v354
      %432 = vst [vmem:[#allocation2 + $0x38] sm:$0xf] %v357
      %433 = vst [vmem:[#allocation2 + $0x40] sm:$0xf] %v355
      %434 = vrot.lane.b32.xlu0 %v354, 127
      %v435 = vpop.permute.xlu0 %434
      %436 = vrot.lane.b32.xlu0 %v357, 127
      %v437 = vpop.permute.xlu0 %436
      %438 = vrot.lane.b32.xlu0 %v355, 127
      %v439 = vpop.permute.xlu0 %438
      %vm440 = vcmp.lt.s32.totalorder %v366, 127
      %v441 = vsel %vm440, %v437, %v439
      %v442 = vsel %vm440, %v435, %v437
      %v443 = vsel %vm440, %v439, %v435
      %v447 = vrot.slane %v442, 4
      %v448 = vrot.slane %v441, 4
      %v449 = vrot.slane %v443, 4
      %453 = vst [vmem:[#allocation2 + $0x30] sm:$0xf0] %v447
      %454 = vst [vmem:[#allocation2 + $0x38] sm:$0xf0] %v448
      %455 = vst [vmem:[#allocation2 + $0x40] sm:$0xf0] %v449
      %456 = vrot.lane.b32.xlu0 %v354, 111
      %v457 = vpop.permute.xlu0 %456
      %458 = vrot.lane.b32.xlu0 %v357, 111
      %v459 = vpop.permute.xlu0 %458
      %460 = vrot.lane.b32.xlu0 %v355, 111
      %v461 = vpop.permute.xlu0 %460
      %vm462 = vcmp.lt.s32.totalorder %v366, 111
      %v463 = vsel %vm462, %v459, %v461
      %v464 = vsel %vm462, %v457, %v459
      %v465 = vsel %vm462, %v461, %v457
      %466 = vst [vmem:[#allocation2 + $0x48] sm:$0xf] %v464
      %467 = vst [vmem:[#allocation2 + $0x50] sm:$0xf] %v463
      %468 = vst [vmem:[#allocation2 + $0x58] sm:$0xf] %v465
      %469 = vrot.lane.b32.xlu0 %v354, 110
      %v470 = vpop.permute.xlu0 %469
      %471 = vrot.lane.b32.xlu0 %v357, 110
      %v472 = vpop.permute.xlu0 %471
      %473 = vrot.lane.b32.xlu0 %v355, 110
      %v474 = vpop.permute.xlu0 %473
      %vm475 = vcmp.lt.s32.totalorder %v366, 110
      %v476 = vsel %vm475, %v472, %v474
      %v477 = vsel %vm475, %v470, %v472
      %v478 = vsel %vm475, %v474, %v470
      %v482 = vrot.slane %v477, 4
      %v483 = vrot.slane %v476, 4
      %v484 = vrot.slane %v478, 4
      %488 = vst [vmem:[#allocation2 + $0x48] sm:$0xf0] %v482
      %489 = vst [vmem:[#allocation2 + $0x50] sm:$0xf0] %v483
      %490 = vst [vmem:[#allocation2 + $0x58] sm:$0xf0] %v484
      %491 = vrot.lane.b32.xlu0 %v354, 109
      %v492 = vpop.permute.xlu0 %491
      %493 = vrot.lane.b32.xlu0 %v357, 109
      %v494 = vpop.permute.xlu0 %493
      %495 = vrot.lane.b32.xlu0 %v355, 109
      %v496 = vpop.permute.xlu0 %495
      %vm497 = vcmp.lt.s32.totalorder %v366, 109
      %v498 = vsel %vm497, %v494, %v496
      %v499 = vsel %vm497, %v492, %v494
      %v500 = vsel %vm497, %v496, %v492
      %501 = vst [vmem:[#allocation2 + $0x60] sm:$0xf] %v499
      %502 = vst [vmem:[#allocation2 + $0x68] sm:$0xf] %v498
      %503 = vst [vmem:[#allocation2 + $0x70] sm:$0xf] %v500
      %v504 = vld [vmem:[%s1] sm:$0x3]
      %v505 = vld [vmem:[#allocation2] sm:$0xff]
      %v506 = vld [vmem:[#allocation2 + $0x8] sm:$0xff]
      %v507 = vld [vmem:[#allocation2 + $0x10] sm:$0xff]
      %v508 = vld [vmem:[#allocation2 + $0x18] sm:$0xff]
      %v509 = vld [vmem:[#allocation2 + $0x20] sm:$0xff]
      %v510 = vld [vmem:[#allocation2 + $0x28] sm:$0xff]
      %v511 = vld [vmem:[#allocation2 + $0x30] sm:$0xff]
      %v512 = vld [vmem:[#allocation2 + $0x38] sm:$0xff]
      %v513 = vld [vmem:[#allocation2 + $0x40] sm:$0xff]
      %v514 = vld [vmem:[#allocation2 + $0x48] sm:$0xff]
      %v515 = vld [vmem:[#allocation2 + $0x50] sm:$0xff]
      %v516 = vld [vmem:[#allocation2 + $0x58] sm:$0xff]
      %v517 = vld [vmem:[#allocation2 + $0x60] sm:$0xf]
      %v518 = vld [vmem:[#allocation2 + $0x68] sm:$0xf]
      %v519 = vld [vmem:[#allocation2 + $0x70] sm:$0xf]
      %v520 = vpack.c.bf16 %v508, %v505
      %v521 = vpack.c.bf16 %v509, %v506
      %v522 = vpack.c.bf16 %v510, %v507
      %v523 = vpack.c.bf16 %v514, %v511
      %v524 = vpack.c.bf16 %v515, %v512
      %v525 = vpack.c.bf16 %v516, %v513
      %v526 = vpack.c.bf16 %v517, %v517
      %v527 = vpack.c.bf16 %v518, %v518
      %v528 = vpack.c.bf16 %v519, %v519
      %vm529 = vcmask 293888
      %v531 = vsel %vm529, %v504, 0
      %vm533 = vcmask 1041408
      %v535 = vsel %vm533, %v526, 0
      %v538 = vsel %vm533, %v527, 0
      %v541 = vsel %vm533, %v528, 0
      %543 = vmatprep.subr.bf16.mxu0 %v521
      %544 = vmatpush1.bf16.msra.mxu0 %v520
      %545 = vmatprep.subr.bf16.mxu0 %v524
      %546 = vmatpush1.bf16.msra.mxu0 %v523
      %547 = vmatprep.subr.bf16.mxu0 %v538
      %548 = vmatpush1.bf16.msra.mxu0 %v535
      %549 = vmatprep.subr.bf16.mxu0 0
      %550 = vmatpush1.bf16.msra.mxu0 0
      %551 = vmatprep.subr.bf16.mxu0 0
      %552 = vmatpush1.bf16.msra.mxu0 0
      %553 = vmatprep.subr.bf16.mxu0 0
      %554 = vmatpush1.bf16.msra.mxu0 0
      %555 = vmatprep.subr.bf16.mxu0 0
      %556 = vmatpush1.bf16.msra.mxu0 0
      %557 = vmatprep.subr.bf16.mxu0 0
      %558 = vmatpush1.bf16.msra.mxu0 0
      %559 = vmatprep.subr.bf16.mxu0 0
      %560 = vmatpush1.bf16.msra.mxu0 0
      %561 = vmatprep.subr.bf16.mxu0 0
      %562 = vmatpush1.bf16.msra.mxu0 0
      %563 = vmatprep.subr.bf16.mxu0 0
      %564 = vmatpush1.bf16.msra.mxu0 0
      %565 = vmatprep.subr.bf16.mxu0 0
      %566 = vmatpush1.bf16.msra.mxu0 0
      %567 = vmatprep.subr.bf16.mxu0 0
      %568 = vmatpush1.bf16.msra.mxu0 0
      %569 = vmatprep.subr.bf16.mxu0 0
      %570 = vmatpush1.bf16.msra.mxu0 0
      %571 = vmatprep.subr.bf16.mxu0 0
      %572 = vmatpush1.bf16.msra.mxu0 0
      %573 = vmatprep.subr.bf16.mxu0 0
      %574 = vmatpush1.bf16.msra.mxu0 0
      %575 = vmatprep.mubr.bf16.mxu0 0
      %576 = vmatmul.mubr.bf16.gmra.mrb[0].mxu0 %v531
      %v577 = vpop.f32.mrb[0].mxu0
      %v578 = vadd.f32 0.0, %v577
      %v579 = vpop.f32.mrb[0].mxu0
      %v580 = vadd.f32 0.0, %v579
      %v581 = vpop.f32.mrb[0].mxu0
      %v582 = vpop.f32.mrb[0].mxu0
      %583 = vdwg.mxu0
      %584 = vmatprep.subr.bf16.mxu0 0
      %585 = vmatpush1.bf16.msra.mxu0 %v522
      %586 = vmatprep.subr.bf16.mxu0 0
      %587 = vmatpush1.bf16.msra.mxu0 %v525
      %588 = vmatprep.subr.bf16.mxu0 0
      %589 = vmatpush1.bf16.msra.mxu0 %v541
      %590 = vmatprep.subr.bf16.mxu0 0
      %591 = vmatpush1.bf16.msra.mxu0 0
      %592 = vmatprep.subr.bf16.mxu0 0
      %593 = vmatpush1.bf16.msra.mxu0 0
      %594 = vmatprep.subr.bf16.mxu0 0
      %595 = vmatpush1.bf16.msra.mxu0 0
      %596 = vmatprep.subr.bf16.mxu0 0
      %597 = vmatpush1.bf16.msra.mxu0 0
      %598 = vmatprep.subr.bf16.mxu0 0
      %599 = vmatpush1.bf16.msra.mxu0 0
      %600 = vmatprep.subr.bf16.mxu0 0
      %601 = vmatpush1.bf16.msra.mxu0 0
      %602 = vmatprep.subr.bf16.mxu0 0
      %603 = vmatpush1.bf16.msra.mxu0 0
      %604 = vmatprep.subr.bf16.mxu0 0
      %605 = vmatpush1.bf16.msra.mxu0 0
      %606 = vmatprep.subr.bf16.mxu0 0
      %607 = vmatpush1.bf16.msra.mxu0 0
      %608 = vmatprep.subr.bf16.mxu0 0
      %609 = vmatpush1.bf16.msra.mxu0 0
      %610 = vmatprep.subr.bf16.mxu0 0
      %611 = vmatpush1.bf16.msra.mxu0 0
      %612 = vmatprep.subr.bf16.mxu0 0
      %613 = vmatpush1.bf16.msra.mxu0 0
      %614 = vmatprep.subr.bf16.mxu0 0
      %615 = vmatpush1.bf16.msra.mxu0 0
      %616 = vmatprep.mubr.bf16.mxu0 0
      %617 = vmatmul.mubr.bf16.gmra.mrb[0].mxu0 %v531
      %v618 = vpop.f32.mrb[0].mxu0
      %v619 = vadd.f32 0.0, %v618
      %v620 = vpop.f32.mrb[0].mxu0
      %v621 = vpop.f32.mrb[0].mxu0
      %v622 = vpop.f32.mrb[0].mxu0
      %623 = vdwg.mxu0
      %v626 = vcombine.low %v578, %v580
      %628 = vst [vmem:[%s291] sm:$0xff] %v626
      %629 = vst [vmem:[%s291 + $0x8] sm:$0xf] %v619
      %v630 = vmul.f32 %v578, %v340
      %v631 = vmul.f32 %v580, %v344
      %v632 = vmul.f32 %v619, %v348
      %vm633 = vcmask 1043456
      %v634 = vsel %vm633, %v630, 0.0
      %v635 = vsel %vm633, %v631, 0.0
      %v636 = vadd.f32 %v634, %v635
      %v637 = vsel %vm633, %v632, 0.0
      %v638 = vadd.f32 %v636, %v637
      %639 = vadd.xlane.f32.xlu0 %v638
      %v640 = vpop.xlane.xlu0 %639
      %vm641 = vcmask 3072
      %642 = vst.msk [vmem:[%s295] sm:$0xf] %vm641, %v640
      %v643 = vmul.f32 %v630, %v630
      %v644 = vmul.f32 %v631, %v631
      %v645 = vmul.f32 %v632, %v632
      %v646 = vsel %vm633, %v643, 0.0
      %v647 = vsel %vm633, %v644, 0.0
      %v648 = vadd.f32 %v646, %v647
      %v649 = vsel %vm633, %v645, 0.0
      %v650 = vadd.f32 %v648, %v649
      %651 = vadd.xlane.f32.xlu0 %v650
      %v652 = vpop.xlane.xlu0 %651
      %653 = vst.msk [vmem:[%s299] sm:$0xf] %vm641, %v652
      %p654 = scmp.lt.s32.totalorder %s19, 1
      %s655 = scalar_select %p654, %s19, 1
      %s656 = smul.addr %s655, 3
      %s657 = smul.addr %s656, 4
      %s658 = scalar_lea.vmem %s5, %s657
      %p659 = scmp.lt.s32.totalorder %s19, 1
      %s660 = scalar_select %p659, %s19, 1
      %s661 = smul.addr %s660, 4
      %s662 = scalar_lea.vmem %s6, %s661
      %p663 = scmp.lt.s32.totalorder %s19, 1
      %s664 = scalar_select %p663, %s19, 1
      %s665 = smul.addr %s664, 4
      %s666 = scalar_lea.vmem %s7, %s665
      // Predicated region
      $region41: #{residual_block_forward.4} parent=39 // pred_check
        %p667 = pneg %p147
      $region42: #{residual_block_forward.4} parent=39 // pred_check_branch
        %669 = sbr.rel (%p667) target = $region44
      $region43: #{residual_block_forward.4} parent=39 // pred_region
        _
      $region44: #{residual_block_forward.4} parent=39 // pred_fallthru
        _
      // Predicated region
      $region45: #{residual_block_forward.4} parent=39 // pred_check
        %p670 = pneg %p173
      $region46: #{residual_block_forward.4} parent=39 // pred_check_branch
        %672 = sbr.rel (%p670) target = $region48
      $region47: #{residual_block_forward.4} parent=39 // pred_region
        _
      $region48: #{residual_block_forward.4} parent=39 // pred_fallthru
        _
      // Predicated region
      $region49: #{residual_block_forward.4} parent=39 // pred_check
        %p673 = pneg %p199
      $region50: #{residual_block_forward.4} parent=39 // pred_check_branch
        %675 = sbr.rel (%p673) target = $region52
      $region51: #{residual_block_forward.4} parent=39 // pred_region
        _
      $region52: #{residual_block_forward.4} parent=39 // pred_fallthru
        _
    $region40: #{residual_block_forward.4} parent=5 // pred_fallthru
      _
    %p676 = scmp.le.s32.totalorder 2, %s14
    // Predicated region
    $region53: #{residual_block_forward.4} parent=5 // pred_check
      %p677 = pneg %p676
    $region54: #{residual_block_forward.4} parent=5 // pred_check_branch
      %679 = sbr.rel (%p677) target = $region56
    $region55: #{residual_block_forward.4} parent=5 // pred_region
      %s680 = ssub.s32 %s14, 2
      // Predicated region
      $region57: #{residual_block_forward.4} parent=55 // pred_check
        %p681 = pneg %p153
      $region58: #{residual_block_forward.4} parent=55 // pred_check_branch
        %683 = sbr.rel (%p681) target = $region60
      $region59: #{residual_block_forward.4} parent=55 // pred_region
        %p684 = scmp.lt.s32.totalorder %s20, 1
        %s685 = scalar_select %p684, %s20, 1
        %s686 = smul.addr %s685, 3
        %s687 = smul.addr %s686, 4
        %s688 = scalar_lea.vmem %s5, %s687
      $region60: #{residual_block_forward.4} parent=55 // pred_fallthru
        _
      // Predicated region
      $region61: #{residual_block_forward.4} parent=55 // pred_check
        %p689 = pneg %p179
      $region62: #{residual_block_forward.4} parent=55 // pred_check_branch
        %691 = sbr.rel (%p689) target = $region64
      $region63: #{residual_block_forward.4} parent=55 // pred_region
        %p692 = scmp.lt.s32.totalorder %s20, 1
        %s693 = scalar_select %p692, %s20, 1
        %s694 = smul.addr %s693, 4
        %s695 = scalar_lea.vmem %s6, %s694
      $region64: #{residual_block_forward.4} parent=55 // pred_fallthru
        _
      // Predicated region
      $region65: #{residual_block_forward.4} parent=55 // pred_check
        %p696 = pneg %p205
      $region66: #{residual_block_forward.4} parent=55 // pred_check_branch
        %698 = sbr.rel (%p696) target = $region68
      $region67: #{residual_block_forward.4} parent=55 // pred_region
        %p699 = scmp.lt.s32.totalorder %s20, 1
        %s700 = scalar_select %p699, %s20, 1
        %s701 = smul.addr %s700, 4
        %s702 = scalar_lea.vmem %s7, %s701
      $region68: #{residual_block_forward.4} parent=55 // pred_fallthru
        _
    $region56: #{residual_block_forward.4} parent=5 // pred_fallthru
      _
  $region6: #{residual_block_forward.4} parent=0 // loop_footer
    %s18 = sadd.s32 1, %s14
  $region7: #{residual_block_forward.4} parent=0 // loop_footer_branch
    %13 = sbr.rel target = $region3
  $region8: #{residual_block_forward.4} parent=0 // loop_exit
    _

</llo_original>
